<compile_context>
chip_gen: v7x
topology: tpu7x:2x2x1
jax: 0.10.0
libtpu: 0.0.40
codegen_flags: <defaults>
</compile_context>

<pallas_src>
import functools

import jax
import jax.numpy as jnp
from jax.experimental import pallas as pl
from jax.experimental.pallas import tpu as pltpu

DILATIONS = (5, 7, 9, 11)
MAXD = max(DILATIONS)
NTAPS = len(DILATIONS) * 9          # 4 dilations x 3 x 3 kernel taps


def cdcm_kernel(x_ref, w1_ref, b1_ref, w2_ref, mask_ref, o_ref,
                pad_ref, slab_ref, *, img_w, dilations):
    nb, _, hw = x_ref.shape
    cmid = w1_ref.shape[0]
    padf = (pad_ref.shape[1] - hw) // 2

    # Hoist weight reads out of the per-image loop.
    w1 = w1_ref[...]                                   # (Cout, Cin)
    b1 = b1_ref[...]                                   # (Cout, 1)
    w2 = w2_ref[...]                                   # (Cout, NTAPS*Cout)

    # Zero only the flat halo; the interior is fully overwritten per image.
    # (Deliberately NOT gated on program_id()==0: the batch axis is "parallel",
    #  and a step-0-only init would be wrong when megacore shards the grid.)
    pad_ref[:, :padf] = jnp.zeros((cmid, padf), jnp.float32)
    pad_ref[:, padf + hw:] = jnp.zeros((cmid, padf), jnp.float32)

    for b in range(nb):
        # ReLU + 1x1 conv (Cin -> Cout) + bias; lane-dense, matmul on the MXU.
        y = jnp.maximum(x_ref[b], 0.0)                          # (Cin, HW)
        mid = jnp.dot(w1, y, preferred_element_type=jnp.float32) + b1
        pad_ref[:, padf:padf + hw] = mid                        # aligned store

        # im2col: 36 shifted (and column-masked) tap planes -> slab rows.
        # A flat shift by dy*W+dx equals the 2-D shifted read except where the
        # column w+dx falls outside [0, W); those columns are masked to zero
        # (the H direction is handled by the zero halo of pad_ref).
        for di, d in enumerate(dilations):
            for ky in range(3):
                for kx in range(3):
                    t = di * 9 + ky * 3 + kx
                    off = padf + (ky - 1) * d * img_w + (kx - 1) * d
                    plane = pad_ref[:, off:off + hw]            # (Cout, HW)
                    if kx != 1:                                  # dx != 0
                        r = di * 3 + kx
                        plane = plane * mask_ref[r:r + 1, :]
                    slab_ref[t * cmid:(t + 1) * cmid, :] = plane

        # Sum of the four dilated 3x3 convs == one MXU matmul:
        #   (Cout, 36*Cout) x (36*Cout, HW) -> (Cout, HW), f32 accumulation.
        out = jnp.dot(w2, slab_ref[...], preferred_element_type=jnp.float32)
        o_ref[b] = out.astype(o_ref.dtype)


@functools.partial(jax.jit, static_argnames=("images_per_step",))
def quant_cdcm(x, w1, b1, w2, *, images_per_step=1):
    """x: (N, Cin, H, W); w1: (Cout, Cin); b1: (Cout,); w2: (4, Cout, Cout, 3, 3)."""
    N, Cin, H, W = x.shape
    Cout = b1.shape[0]
    HW = H * W
    nb = images_per_step
    assert N % nb == 0, "images_per_step must divide the batch"

    # Flat halo big enough for the largest shift |dy*W + dx| = MAXD*(W+1),
    # rounded up to a lane multiple so the interior starts 128-aligned.
    padf = ((MAXD * (W + 1) + 127) // 128) * 128

    # Free reshape for contiguous NCHW: spatial plane flattened onto lanes.
    x_flat = x.reshape(N, Cin, HW).astype(jnp.float32)
    w1m = w1.astype(jnp.float32)                                  # (Cout, Cin)
    b1c = b1.reshape(Cout, 1).astype(jnp.float32)                 # (Cout, 1)
    # Column order must match slab rows: ((di*3 + ky)*3 + kx)*Cout + ci.
    w2m = jnp.transpose(w2, (1, 0, 3, 4, 2)).reshape(
        Cout, NTAPS * Cout).astype(jnp.float32)

    # Column-wrap masks, one per (dilation, kx).
    col = jnp.arange(HW, dtype=jnp.int32) % W
    masks = jnp.stack([
        ((col + (kx - 1) * d >= 0) & (col + (kx - 1) * d < W)).astype(jnp.float32)
        for d in DILATIONS for kx in range(3)])                   # (12, HW)

    kernel = functools.partial(cdcm_kernel, img_w=W, dilations=DILATIONS)

    out_flat = pl.pallas_call(
        kernel,
        out_shape=jax.ShapeDtypeStruct((N, Cout, HW), jnp.float32),
        grid=(N // nb,),
        in_specs=[
            pl.BlockSpec((nb, Cin, HW), lambda n: (n, 0, 0)),          # x
            pl.BlockSpec((Cout, Cin), lambda n: (0, 0)),               # w1
            pl.BlockSpec((Cout, 1), lambda n: (0, 0)),                 # b1
            pl.BlockSpec((Cout, NTAPS * Cout), lambda n: (0, 0)),      # w2 (im2col)
            pl.BlockSpec((len(DILATIONS) * 3, HW), lambda n: (0, 0)),  # masks
        ],
        out_specs=pl.BlockSpec((nb, Cout, HW), lambda n: (n, 0, 0)),
        scratch_shapes=[
            pltpu.VMEM((Cout, 2 * padf + HW), jnp.float32),   # flat padded mid
            pltpu.VMEM((NTAPS * Cout, HW), jnp.float32),      # im2col slab
        ],
        compiler_params=pltpu.CompilerParams(
            dimension_semantics=("parallel",),
            vmem_limit_bytes=32 * 1024 * 1024),
    )(x_flat, w1m, b1c, w2m, masks)

    return out_flat.reshape(N, Cout, H, W)


def reference(x, w1, b1, w2):
    """Pure-JAX NCHW reference mirroring the PyTorch float forward."""
    hp = jax.lax.Precision.HIGHEST
    y = jnp.maximum(x, 0.0)
    mid = jax.lax.conv_general_dilated(
        y, w1[:, :, None, None], (1, 1), "VALID",
        dimension_numbers=("NCHW", "OIHW", "NCHW"), precision=hp)
    mid = mid + b1.reshape(1, -1, 1, 1)
    out = jnp.zeros_like(mid)
    for di, d in enumerate(DILATIONS):
        out = out + jax.lax.conv_general_dilated(
            mid, w2[di], (1, 1), ((d, d), (d, d)),
            rhs_dilation=(d, d),
            dimension_numbers=("NCHW", "OIHW", "NCHW"), precision=hp)
    return out


if __name__ == "__main__":
    key = jax.random.PRNGKey(0)
    kx_, k1, kb, k2 = jax.random.split(key, 4)

    N, CIN, COUT, H, W = 2, 8, 4, 16, 16
    x = jax.random.normal(kx_, (N, CIN, H, W), jnp.float32)

    # conv1: weight (COUT, CIN, 1, 1) stored as (COUT, CIN); bias (COUT,)
    #        (init'd to 0 in the module but learnable -> use small randoms).
    # conv2_k (k=1..4): weight (COUT, COUT, 3, 3), dilation/padding 5/7/9/11.
    w1 = jax.random.normal(k1, (COUT, CIN), jnp.float32) * 0.1
    b1 = jax.random.normal(kb, (COUT,), jnp.float32) * 0.1
    w2 = jax.random.normal(
        k2, (len(DILATIONS), COUT, COUT, 3, 3), jnp.float32) * 0.1

    out = quant_cdcm(x, w1, b1, w2)
    out = jax.block_until_ready(out)

    ref = reference(x, w1, b1, w2)
    assert out.shape == (N, COUT, H, W)
    # Tolerance covers MXU matmul accumulation-order/precision differences vs.
    # XLA's conv; an indexing or mask bug would produce O(0.1) errors.
    assert jnp.allclose(out, ref, atol=5e-3, rtol=5e-3), float(
        jnp.max(jnp.abs(out - ref)))
    print("KERNEL_OK")
</pallas_src>

<mosaic_0001>
module attributes {stable_mosaic.version = 11 : i64} {
  func.func @cdcm_kernel(%arg0: i32, %arg1: memref<1x8x256xf32, #tpu.memory_space<vmem>>, %arg2: memref<4x8xf32, #tpu.memory_space<vmem>>, %arg3: memref<4x1xf32, #tpu.memory_space<vmem>>, %arg4: memref<4x144xf32, #tpu.memory_space<vmem>>, %arg5: memref<12x256xf32, #tpu.memory_space<vmem>>, %arg6: memref<1x4x256xf32, #tpu.memory_space<vmem>>, %arg7: memref<4x768xf32, #tpu.memory_space<vmem>>, %arg8: memref<144x256xf32, #tpu.memory_space<vmem>>) attributes {dimension_semantics = [#tpu.dimension_semantics<parallel>], iteration_bounds = array<i64: 2>, scalar_prefetch = 0 : i64, scratch_operands = 2 : i64, tpu.core_type = #tpu.core_type<tc>, window_params = [{transform_indices = @transform_0, window_bounds = array<i64: 1, 8, 256>}, {pipeline_mode = #tpu.pipeline_mode<synchronous>, transform_indices = @transform_1, window_bounds = array<i64: 4, 8>}, {pipeline_mode = #tpu.pipeline_mode<synchronous>, transform_indices = @transform_2, window_bounds = array<i64: 4, 1>}, {pipeline_mode = #tpu.pipeline_mode<synchronous>, transform_indices = @transform_3, window_bounds = array<i64: 4, 144>}, {pipeline_mode = #tpu.pipeline_mode<synchronous>, transform_indices = @transform_4, window_bounds = array<i64: 12, 256>}, {transform_indices = @transform_5, window_bounds = array<i64: 1, 4, 256>}]} {
    %c0 = arith.constant 0 : index
    %c0_0 = arith.constant 0 : index
    %0 = vector.load %arg2[%c0, %c0_0] : memref<4x8xf32, #tpu.memory_space<vmem>>, vector<4x8xf32>
    %c0_1 = arith.constant 0 : index
    %c0_2 = arith.constant 0 : index
    %1 = vector.load %arg3[%c0_1, %c0_2] : memref<4x1xf32, #tpu.memory_space<vmem>>, vector<4x1xf32>
    %c0_3 = arith.constant 0 : index
    %c0_4 = arith.constant 0 : index
    %2 = vector.load %arg4[%c0_3, %c0_4] : memref<4x144xf32, #tpu.memory_space<vmem>>, vector<4x144xf32>
    %cst = arith.constant 0.000000e+00 : f32
    %3 = vector.broadcast %cst : f32 to vector<4x256xf32>
    %c0_5 = arith.constant 0 : index
    %c0_6 = arith.constant 0 : index
    %4 = vector.load %arg7[%c0_5, %c0_6] : memref<4x768xf32, #tpu.memory_space<vmem>>, vector<4x256xf32>
    tpu.vector_store %arg7[%c0_5, %c0_6], %3 {strides = array<i32>} : memref<4x768xf32, #tpu.memory_space<vmem>>, vector<4x256xf32>,
    %cst_7 = arith.constant 0.000000e+00 : f32
    %5 = vector.broadcast %cst_7 : f32 to vector<4x256xf32>
    %c0_8 = arith.constant 0 : index
    %c512 = arith.constant 512 : index
    %6 = vector.load %arg7[%c0_8, %c512] : memref<4x768xf32, #tpu.memory_space<vmem>>, vector<4x256xf32>
    tpu.vector_store %arg7[%c0_8, %c512], %5 {strides = array<i32>} : memref<4x768xf32, #tpu.memory_space<vmem>>, vector<4x256xf32>,
    %c0_9 = arith.constant 0 : index
    %c0_10 = arith.constant 0 : index
    %c0_11 = arith.constant 0 : index
    %7 = vector.load %arg1[%c0_9, %c0_10, %c0_11] : memref<1x8x256xf32, #tpu.memory_space<vmem>>, vector<1x8x256xf32>
    %8 = vector.shape_cast %7 : vector<1x8x256xf32> to vector<8x256xf32>
    %cst_12 = arith.constant 0.000000e+00 : f32
    %9 = vector.broadcast %cst_12 : f32 to vector<8x256xf32>
    %10 = arith.maximumf %8, %9 : vector<8x256xf32>
    %cst_13 = arith.constant dense<0.000000e+00> : vector<4x256xf32>
    %11 = tpu.matmul %0, %10, %cst_13 {dimension_numbers = #tpu.dot_dimension_numbers<[1], [0], [0], [1], [0, 0, 1, 1], [], []>} : vector<4x8xf32>, vector<8x256xf32>, vector<4x256xf32> -> vector<4x256xf32>
    %12 = vector.broadcast %1 : vector<4x1xf32> to vector<4x256xf32>
    %13 = arith.addf %11, %12 : vector<4x256xf32>
    %c0_14 = arith.constant 0 : index
    %c256 = arith.constant 256 : index
    %14 = vector.load %arg7[%c0_14, %c256] : memref<4x768xf32, #tpu.memory_space<vmem>>, vector<4x256xf32>
    tpu.vector_store %arg7[%c0_14, %c256], %13 {strides = array<i32>} : memref<4x768xf32, #tpu.memory_space<vmem>>, vector<4x256xf32>,
    %c0_15 = arith.constant 0 : index
    %c171 = arith.constant 171 : index
    %15 = vector.load %arg7[%c0_15, %c171] : memref<4x768xf32, #tpu.memory_space<vmem>>, vector<4x256xf32>
    %c0_16 = arith.constant 0 : index
    %c0_17 = arith.constant 0 : index
    %16 = vector.load %arg5[%c0_16, %c0_17] : memref<12x256xf32, #tpu.memory_space<vmem>>, vector<1x256xf32>
    %17 = vector.broadcast %16 : vector<1x256xf32> to vector<4x256xf32>
    %18 = arith.mulf %15, %17 : vector<4x256xf32>
    %c0_18 = arith.constant 0 : index
    %c0_19 = arith.constant 0 : index
    %19 = vector.load %arg8[%c0_18, %c0_19] : memref<144x256xf32, #tpu.memory_space<vmem>>, vector<4x256xf32>
    tpu.vector_store %arg8[%c0_18, %c0_19], %18 {strides = array<i32>} : memref<144x256xf32, #tpu.memory_space<vmem>>, vector<4x256xf32>,
    %c0_20 = arith.constant 0 : index
    %c176 = arith.constant 176 : index
    %20 = vector.load %arg7[%c0_20, %c176] : memref<4x768xf32, #tpu.memory_space<vmem>>, vector<4x256xf32>
    %c4 = arith.constant 4 : index
    %c0_21 = arith.constant 0 : index
    %21 = vector.load %arg8[%c4, %c0_21] : memref<144x256xf32, #tpu.memory_space<vmem>>, vector<4x256xf32>
    tpu.vector_store %arg8[%c4, %c0_21], %20 {strides = array<i32>} : memref<144x256xf32, #tpu.memory_space<vmem>>, vector<4x256xf32>,
    %c0_22 = arith.constant 0 : index
    %c181 = arith.constant 181 : index
    %22 = vector.load %arg7[%c0_22, %c181] : memref<4x768xf32, #tpu.memory_space<vmem>>, vector<4x256xf32>
    %c2 = arith.constant 2 : index
    %c0_23 = arith.constant 0 : index
    %23 = vector.load %arg5[%c2, %c0_23] : memref<12x256xf32, #tpu.memory_space<vmem>>, vector<1x256xf32>
    %24 = vector.broadcast %23 : vector<1x256xf32> to vector<4x256xf32>
    %25 = arith.mulf %22, %24 : vector<4x256xf32>
    %c8 = arith.constant 8 : index
    %c0_24 = arith.constant 0 : index
    %26 = vector.load %arg8[%c8, %c0_24] : memref<144x256xf32, #tpu.memory_space<vmem>>, vector<4x256xf32>
    tpu.vector_store %arg8[%c8, %c0_24], %25 {strides = array<i32>} : memref<144x256xf32, #tpu.memory_space<vmem>>, vector<4x256xf32>,
    %c0_25 = arith.constant 0 : index
    %c251 = arith.constant 251 : index
    %27 = vector.load %arg7[%c0_25, %c251] : memref<4x768xf32, #tpu.memory_space<vmem>>, vector<4x256xf32>
    %c0_26 = arith.constant 0 : index
    %c0_27 = arith.constant 0 : index
    %28 = vector.load %arg5[%c0_26, %c0_27] : memref<12x256xf32, #tpu.memory_space<vmem>>, vector<1x256xf32>
    %29 = vector.broadcast %28 : vector<1x256xf32> to vector<4x256xf32>
    %30 = arith.mulf %27, %29 : vector<4x256xf32>
    %c12 = arith.constant 12 : index
    %c0_28 = arith.constant 0 : index
    %31 = vector.load %arg8[%c12, %c0_28] : memref<144x256xf32, #tpu.memory_space<vmem>>, vector<4x256xf32>
    tpu.vector_store %arg8[%c12, %c0_28], %30 {strides = array<i32>} : memref<144x256xf32, #tpu.memory_space<vmem>>, vector<4x256xf32>,
    %c0_29 = arith.constant 0 : index
    %c256_30 = arith.constant 256 : index
    %32 = vector.load %arg7[%c0_29, %c256_30] : memref<4x768xf32, #tpu.memory_space<vmem>>, vector<4x256xf32>
    %c16 = arith.constant 16 : index
    %c0_31 = arith.constant 0 : index
    %33 = vector.load %arg8[%c16, %c0_31] : memref<144x256xf32, #tpu.memory_space<vmem>>, vector<4x256xf32>
    tpu.vector_store %arg8[%c16, %c0_31], %32 {strides = array<i32>} : memref<144x256xf32, #tpu.memory_space<vmem>>, vector<4x256xf32>,
    %c0_32 = arith.constant 0 : index
    %c261 = arith.constant 261 : index
    %34 = vector.load %arg7[%c0_32, %c261] : memref<4x768xf32, #tpu.memory_space<vmem>>, vector<4x256xf32>
    %c2_33 = arith.constant 2 : index
    %c0_34 = arith.constant 0 : index
    %35 = vector.load %arg5[%c2_33, %c0_34] : memref<12x256xf32, #tpu.memory_space<vmem>>, vector<1x256xf32>
    %36 = vector.broadcast %35 : vector<1x256xf32> to vector<4x256xf32>
    %37 = arith.mulf %34, %36 : vector<4x256xf32>
    %c20 = arith.constant 20 : index
    %c0_35 = arith.constant 0 : index
    %38 = vector.load %arg8[%c20, %c0_35] : memref<144x256xf32, #tpu.memory_space<vmem>>, vector<4x256xf32>
    tpu.vector_store %arg8[%c20, %c0_35], %37 {strides = array<i32>} : memref<144x256xf32, #tpu.memory_space<vmem>>, vector<4x256xf32>,
    %c0_36 = arith.constant 0 : index
    %c331 = arith.constant 331 : index
    %39 = vector.load %arg7[%c0_36, %c331] : memref<4x768xf32, #tpu.memory_space<vmem>>, vector<4x256xf32>
    %c0_37 = arith.constant 0 : index
    %c0_38 = arith.constant 0 : index
    %40 = vector.load %arg5[%c0_37, %c0_38] : memref<12x256xf32, #tpu.memory_space<vmem>>, vector<1x256xf32>
    %41 = vector.broadcast %40 : vector<1x256xf32> to vector<4x256xf32>
    %42 = arith.mulf %39, %41 : vector<4x256xf32>
    %c24 = arith.constant 24 : index
    %c0_39 = arith.constant 0 : index
    %43 = vector.load %arg8[%c24, %c0_39] : memref<144x256xf32, #tpu.memory_space<vmem>>, vector<4x256xf32>
    tpu.vector_store %arg8[%c24, %c0_39], %42 {strides = array<i32>} : memref<144x256xf32, #tpu.memory_space<vmem>>, vector<4x256xf32>,
    %c0_40 = arith.constant 0 : index
    %c336 = arith.constant 336 : index
    %44 = vector.load %arg7[%c0_40, %c336] : memref<4x768xf32, #tpu.memory_space<vmem>>, vector<4x256xf32>
    %c28 = arith.constant 28 : index
    %c0_41 = arith.constant 0 : index
    %45 = vector.load %arg8[%c28, %c0_41] : memref<144x256xf32, #tpu.memory_space<vmem>>, vector<4x256xf32>
    tpu.vector_store %arg8[%c28, %c0_41], %44 {strides = array<i32>} : memref<144x256xf32, #tpu.memory_space<vmem>>, vector<4x256xf32>,
    %c0_42 = arith.constant 0 : index
    %c341 = arith.constant 341 : index
    %46 = vector.load %arg7[%c0_42, %c341] : memref<4x768xf32, #tpu.memory_space<vmem>>, vector<4x256xf32>
    %c2_43 = arith.constant 2 : index
    %c0_44 = arith.constant 0 : index
    %47 = vector.load %arg5[%c2_43, %c0_44] : memref<12x256xf32, #tpu.memory_space<vmem>>, vector<1x256xf32>
    %48 = vector.broadcast %47 : vector<1x256xf32> to vector<4x256xf32>
    %49 = arith.mulf %46, %48 : vector<4x256xf32>
    %c32 = arith.constant 32 : index
    %c0_45 = arith.constant 0 : index
    %50 = vector.load %arg8[%c32, %c0_45] : memref<144x256xf32, #tpu.memory_space<vmem>>, vector<4x256xf32>
    tpu.vector_store %arg8[%c32, %c0_45], %49 {strides = array<i32>} : memref<144x256xf32, #tpu.memory_space<vmem>>, vector<4x256xf32>,
    %c0_46 = arith.constant 0 : index
    %c137 = arith.constant 137 : index
    %51 = vector.load %arg7[%c0_46, %c137] : memref<4x768xf32, #tpu.memory_space<vmem>>, vector<4x256xf32>
    %c3 = arith.constant 3 : index
    %c0_47 = arith.constant 0 : index
    %52 = vector.load %arg5[%c3, %c0_47] : memref<12x256xf32, #tpu.memory_space<vmem>>, vector<1x256xf32>
    %53 = vector.broadcast %52 : vector<1x256xf32> to vector<4x256xf32>
    %54 = arith.mulf %51, %53 : vector<4x256xf32>
    %c36 = arith.constant 36 : index
    %c0_48 = arith.constant 0 : index
    %55 = vector.load %arg8[%c36, %c0_48] : memref<144x256xf32, #tpu.memory_space<vmem>>, vector<4x256xf32>
    tpu.vector_store %arg8[%c36, %c0_48], %54 {strides = array<i32>} : memref<144x256xf32, #tpu.memory_space<vmem>>, vector<4x256xf32>,
    %c0_49 = arith.constant 0 : index
    %c144 = arith.constant 144 : index
    %56 = vector.load %arg7[%c0_49, %c144] : memref<4x768xf32, #tpu.memory_space<vmem>>, vector<4x256xf32>
    %c40 = arith.constant 40 : index
    %c0_50 = arith.constant 0 : index
    %57 = vector.load %arg8[%c40, %c0_50] : memref<144x256xf32, #tpu.memory_space<vmem>>, vector<4x256xf32>
    tpu.vector_store %arg8[%c40, %c0_50], %56 {strides = array<i32>} : memref<144x256xf32, #tpu.memory_space<vmem>>, vector<4x256xf32>,
    %c0_51 = arith.constant 0 : index
    %c151 = arith.constant 151 : index
    %58 = vector.load %arg7[%c0_51, %c151] : memref<4x768xf32, #tpu.memory_space<vmem>>, vector<4x256xf32>
    %c5 = arith.constant 5 : index
    %c0_52 = arith.constant 0 : index
    %59 = vector.load %arg5[%c5, %c0_52] : memref<12x256xf32, #tpu.memory_space<vmem>>, vector<1x256xf32>
    %60 = vector.broadcast %59 : vector<1x256xf32> to vector<4x256xf32>
    %61 = arith.mulf %58, %60 : vector<4x256xf32>
    %c44 = arith.constant 44 : index
    %c0_53 = arith.constant 0 : index
    %62 = vector.load %arg8[%c44, %c0_53] : memref<144x256xf32, #tpu.memory_space<vmem>>, vector<4x256xf32>
    tpu.vector_store %arg8[%c44, %c0_53], %61 {strides = array<i32>} : memref<144x256xf32, #tpu.memory_space<vmem>>, vector<4x256xf32>,
    %c0_54 = arith.constant 0 : index
    %c249 = arith.constant 249 : index
    %63 = vector.load %arg7[%c0_54, %c249] : memref<4x768xf32, #tpu.memory_space<vmem>>, vector<4x256xf32>
    %c3_55 = arith.constant 3 : index
    %c0_56 = arith.constant 0 : index
    %64 = vector.load %arg5[%c3_55, %c0_56] : memref<12x256xf32, #tpu.memory_space<vmem>>, vector<1x256xf32>
    %65 = vector.broadcast %64 : vector<1x256xf32> to vector<4x256xf32>
    %66 = arith.mulf %63, %65 : vector<4x256xf32>
    %c48 = arith.constant 48 : index
    %c0_57 = arith.constant 0 : index
    %67 = vector.load %arg8[%c48, %c0_57] : memref<144x256xf32, #tpu.memory_space<vmem>>, vector<4x256xf32>
    tpu.vector_store %arg8[%c48, %c0_57], %66 {strides = array<i32>} : memref<144x256xf32, #tpu.memory_space<vmem>>, vector<4x256xf32>,
    %c0_58 = arith.constant 0 : index
    %c256_59 = arith.constant 256 : index
    %68 = vector.load %arg7[%c0_58, %c256_59] : memref<4x768xf32, #tpu.memory_space<vmem>>, vector<4x256xf32>
    %c52 = arith.constant 52 : index
    %c0_60 = arith.constant 0 : index
    %69 = vector.load %arg8[%c52, %c0_60] : memref<144x256xf32, #tpu.memory_space<vmem>>, vector<4x256xf32>
    tpu.vector_store %arg8[%c52, %c0_60], %68 {strides = array<i32>} : memref<144x256xf32, #tpu.memory_space<vmem>>, vector<4x256xf32>,
    %c0_61 = arith.constant 0 : index
    %c263 = arith.constant 263 : index
    %70 = vector.load %arg7[%c0_61, %c263] : memref<4x768xf32, #tpu.memory_space<vmem>>, vector<4x256xf32>
    %c5_62 = arith.constant 5 : index
    %c0_63 = arith.constant 0 : index
    %71 = vector.load %arg5[%c5_62, %c0_63] : memref<12x256xf32, #tpu.memory_space<vmem>>, vector<1x256xf32>
    %72 = vector.broadcast %71 : vector<1x256xf32> to vector<4x256xf32>
    %73 = arith.mulf %70, %72 : vector<4x256xf32>
    %c56 = arith.constant 56 : index
    %c0_64 = arith.constant 0 : index
    %74 = vector.load %arg8[%c56, %c0_64] : memref<144x256xf32, #tpu.memory_space<vmem>>, vector<4x256xf32>
    tpu.vector_store %arg8[%c56, %c0_64], %73 {strides = array<i32>} : memref<144x256xf32, #tpu.memory_space<vmem>>, vector<4x256xf32>,
    %c0_65 = arith.constant 0 : index
    %c361 = arith.constant 361 : index
    %75 = vector.load %arg7[%c0_65, %c361] : memref<4x768xf32, #tpu.memory_space<vmem>>, vector<4x256xf32>
    %c3_66 = arith.constant 3 : index
    %c0_67 = arith.constant 0 : index
    %76 = vector.load %arg5[%c3_66, %c0_67] : memref<12x256xf32, #tpu.memory_space<vmem>>, vector<1x256xf32>
    %77 = vector.broadcast %76 : vector<1x256xf32> to vector<4x256xf32>
    %78 = arith.mulf %75, %77 : vector<4x256xf32>
    %c60 = arith.constant 60 : index
    %c0_68 = arith.constant 0 : index
    %79 = vector.load %arg8[%c60, %c0_68] : memref<144x256xf32, #tpu.memory_space<vmem>>, vector<4x256xf32>
    tpu.vector_store %arg8[%c60, %c0_68], %78 {strides = array<i32>} : memref<144x256xf32, #tpu.memory_space<vmem>>, vector<4x256xf32>,
    %c0_69 = arith.constant 0 : index
    %c368 = arith.constant 368 : index
    %80 = vector.load %arg7[%c0_69, %c368] : memref<4x768xf32, #tpu.memory_space<vmem>>, vector<4x256xf32>
    %c64 = arith.constant 64 : index
    %c0_70 = arith.constant 0 : index
    %81 = vector.load %arg8[%c64, %c0_70] : memref<144x256xf32, #tpu.memory_space<vmem>>, vector<4x256xf32>
    tpu.vector_store %arg8[%c64, %c0_70], %80 {strides = array<i32>} : memref<144x256xf32, #tpu.memory_space<vmem>>, vector<4x256xf32>,
    %c0_71 = arith.constant 0 : index
    %c375 = arith.constant 375 : index
    %82 = vector.load %arg7[%c0_71, %c375] : memref<4x768xf32, #tpu.memory_space<vmem>>, vector<4x256xf32>
    %c5_72 = arith.constant 5 : index
    %c0_73 = arith.constant 0 : index
    %83 = vector.load %arg5[%c5_72, %c0_73] : memref<12x256xf32, #tpu.memory_space<vmem>>, vector<1x256xf32>
    %84 = vector.broadcast %83 : vector<1x256xf32> to vector<4x256xf32>
    %85 = arith.mulf %82, %84 : vector<4x256xf32>
    %c68 = arith.constant 68 : index
    %c0_74 = arith.constant 0 : index
    %86 = vector.load %arg8[%c68, %c0_74] : memref<144x256xf32, #tpu.memory_space<vmem>>, vector<4x256xf32>
    tpu.vector_store %arg8[%c68, %c0_74], %85 {strides = array<i32>} : memref<144x256xf32, #tpu.memory_space<vmem>>, vector<4x256xf32>,
    %c0_75 = arith.constant 0 : index
    %c103 = arith.constant 103 : index
    %87 = vector.load %arg7[%c0_75, %c103] : memref<4x768xf32, #tpu.memory_space<vmem>>, vector<4x256xf32>
    %c6 = arith.constant 6 : index
    %c0_76 = arith.constant 0 : index
    %88 = vector.load %arg5[%c6, %c0_76] : memref<12x256xf32, #tpu.memory_space<vmem>>, vector<1x256xf32>
    %89 = vector.broadcast %88 : vector<1x256xf32> to vector<4x256xf32>
    %90 = arith.mulf %87, %89 : vector<4x256xf32>
    %c72 = arith.constant 72 : index
    %c0_77 = arith.constant 0 : index
    %91 = vector.load %arg8[%c72, %c0_77] : memref<144x256xf32, #tpu.memory_space<vmem>>, vector<4x256xf32>
    tpu.vector_store %arg8[%c72, %c0_77], %90 {strides = array<i32>} : memref<144x256xf32, #tpu.memory_space<vmem>>, vector<4x256xf32>,
    %c0_78 = arith.constant 0 : index
    %c112 = arith.constant 112 : index
    %92 = vector.load %arg7[%c0_78, %c112] : memref<4x768xf32, #tpu.memory_space<vmem>>, vector<4x256xf32>
    %c76 = arith.constant 76 : index
    %c0_79 = arith.constant 0 : index
    %93 = vector.load %arg8[%c76, %c0_79] : memref<144x256xf32, #tpu.memory_space<vmem>>, vector<4x256xf32>
    tpu.vector_store %arg8[%c76, %c0_79], %92 {strides = array<i32>} : memref<144x256xf32, #tpu.memory_space<vmem>>, vector<4x256xf32>,
    %c0_80 = arith.constant 0 : index
    %c121 = arith.constant 121 : index
    %94 = vector.load %arg7[%c0_80, %c121] : memref<4x768xf32, #tpu.memory_space<vmem>>, vector<4x256xf32>
    %c8_81 = arith.constant 8 : index
    %c0_82 = arith.constant 0 : index
    %95 = vector.load %arg5[%c8_81, %c0_82] : memref<12x256xf32, #tpu.memory_space<vmem>>, vector<1x256xf32>
    %96 = vector.broadcast %95 : vector<1x256xf32> to vector<4x256xf32>
    %97 = arith.mulf %94, %96 : vector<4x256xf32>
    %c80 = arith.constant 80 : index
    %c0_83 = arith.constant 0 : index
    %98 = vector.load %arg8[%c80, %c0_83] : memref<144x256xf32, #tpu.memory_space<vmem>>, vector<4x256xf32>
    tpu.vector_store %arg8[%c80, %c0_83], %97 {strides = array<i32>} : memref<144x256xf32, #tpu.memory_space<vmem>>, vector<4x256xf32>,
    %c0_84 = arith.constant 0 : index
    %c247 = arith.constant 247 : index
    %99 = vector.load %arg7[%c0_84, %c247] : memref<4x768xf32, #tpu.memory_space<vmem>>, vector<4x256xf32>
    %c6_85 = arith.constant 6 : index
    %c0_86 = arith.constant 0 : index
    %100 = vector.load %arg5[%c6_85, %c0_86] : memref<12x256xf32, #tpu.memory_space<vmem>>, vector<1x256xf32>
    %101 = vector.broadcast %100 : vector<1x256xf32> to vector<4x256xf32>
    %102 = arith.mulf %99, %101 : vector<4x256xf32>
    %c84 = arith.constant 84 : index
    %c0_87 = arith.constant 0 : index
    %103 = vector.load %arg8[%c84, %c0_87] : memref<144x256xf32, #tpu.memory_space<vmem>>, vector<4x256xf32>
    tpu.vector_store %arg8[%c84, %c0_87], %102 {strides = array<i32>} : memref<144x256xf32, #tpu.memory_space<vmem>>, vector<4x256xf32>,
    %c0_88 = arith.constant 0 : index
    %c256_89 = arith.constant 256 : index
    %104 = vector.load %arg7[%c0_88, %c256_89] : memref<4x768xf32, #tpu.memory_space<vmem>>, vector<4x256xf32>
    %c88 = arith.constant 88 : index
    %c0_90 = arith.constant 0 : index
    %105 = vector.load %arg8[%c88, %c0_90] : memref<144x256xf32, #tpu.memory_space<vmem>>, vector<4x256xf32>
    tpu.vector_store %arg8[%c88, %c0_90], %104 {strides = array<i32>} : memref<144x256xf32, #tpu.memory_space<vmem>>, vector<4x256xf32>,
    %c0_91 = arith.constant 0 : index
    %c265 = arith.constant 265 : index
    %106 = vector.load %arg7[%c0_91, %c265] : memref<4x768xf32, #tpu.memory_space<vmem>>, vector<4x256xf32>
    %c8_92 = arith.constant 8 : index
    %c0_93 = arith.constant 0 : index
    %107 = vector.load %arg5[%c8_92, %c0_93] : memref<12x256xf32, #tpu.memory_space<vmem>>, vector<1x256xf32>
    %108 = vector.broadcast %107 : vector<1x256xf32> to vector<4x256xf32>
    %109 = arith.mulf %106, %108 : vector<4x256xf32>
    %c92 = arith.constant 92 : index
    %c0_94 = arith.constant 0 : index
    %110 = vector.load %arg8[%c92, %c0_94] : memref<144x256xf32, #tpu.memory_space<vmem>>, vector<4x256xf32>
    tpu.vector_store %arg8[%c92, %c0_94], %109 {strides = array<i32>} : memref<144x256xf32, #tpu.memory_space<vmem>>, vector<4x256xf32>,
    %c0_95 = arith.constant 0 : index
    %c391 = arith.constant 391 : index
    %111 = vector.load %arg7[%c0_95, %c391] : memref<4x768xf32, #tpu.memory_space<vmem>>, vector<4x256xf32>
    %c6_96 = arith.constant 6 : index
    %c0_97 = arith.constant 0 : index
    %112 = vector.load %arg5[%c6_96, %c0_97] : memref<12x256xf32, #tpu.memory_space<vmem>>, vector<1x256xf32>
    %113 = vector.broadcast %112 : vector<1x256xf32> to vector<4x256xf32>
    %114 = arith.mulf %111, %113 : vector<4x256xf32>
    %c96 = arith.constant 96 : index
    %c0_98 = arith.constant 0 : index
    %115 = vector.load %arg8[%c96, %c0_98] : memref<144x256xf32, #tpu.memory_space<vmem>>, vector<4x256xf32>
    tpu.vector_store %arg8[%c96, %c0_98], %114 {strides = array<i32>} : memref<144x256xf32, #tpu.memory_space<vmem>>, vector<4x256xf32>,
    %c0_99 = arith.constant 0 : index
    %c400 = arith.constant 400 : index
    %116 = vector.load %arg7[%c0_99, %c400] : memref<4x768xf32, #tpu.memory_space<vmem>>, vector<4x256xf32>
    %c100 = arith.constant 100 : index
    %c0_100 = arith.constant 0 : index
    %117 = vector.load %arg8[%c100, %c0_100] : memref<144x256xf32, #tpu.memory_space<vmem>>, vector<4x256xf32>
    tpu.vector_store %arg8[%c100, %c0_100], %116 {strides = array<i32>} : memref<144x256xf32, #tpu.memory_space<vmem>>, vector<4x256xf32>,
    %c0_101 = arith.constant 0 : index
    %c409 = arith.constant 409 : index
    %118 = vector.load %arg7[%c0_101, %c409] : memref<4x768xf32, #tpu.memory_space<vmem>>, vector<4x256xf32>
    %c8_102 = arith.constant 8 : index
    %c0_103 = arith.constant 0 : index
    %119 = vector.load %arg5[%c8_102, %c0_103] : memref<12x256xf32, #tpu.memory_space<vmem>>, vector<1x256xf32>
    %120 = vector.broadcast %119 : vector<1x256xf32> to vector<4x256xf32>
    %121 = arith.mulf %118, %120 : vector<4x256xf32>
    %c104 = arith.constant 104 : index
    %c0_104 = arith.constant 0 : index
    %122 = vector.load %arg8[%c104, %c0_104] : memref<144x256xf32, #tpu.memory_space<vmem>>, vector<4x256xf32>
    tpu.vector_store %arg8[%c104, %c0_104], %121 {strides = array<i32>} : memref<144x256xf32, #tpu.memory_space<vmem>>, vector<4x256xf32>,
    %c0_105 = arith.constant 0 : index
    %c69 = arith.constant 69 : index
    %123 = vector.load %arg7[%c0_105, %c69] : memref<4x768xf32, #tpu.memory_space<vmem>>, vector<4x256xf32>
    %c9 = arith.constant 9 : index
    %c0_106 = arith.constant 0 : index
    %124 = vector.load %arg5[%c9, %c0_106] : memref<12x256xf32, #tpu.memory_space<vmem>>, vector<1x256xf32>
    %125 = vector.broadcast %124 : vector<1x256xf32> to vector<4x256xf32>
    %126 = arith.mulf %123, %125 : vector<4x256xf32>
    %c108 = arith.constant 108 : index
    %c0_107 = arith.constant 0 : index
    %127 = vector.load %arg8[%c108, %c0_107] : memref<144x256xf32, #tpu.memory_space<vmem>>, vector<4x256xf32>
    tpu.vector_store %arg8[%c108, %c0_107], %126 {strides = array<i32>} : memref<144x256xf32, #tpu.memory_space<vmem>>, vector<4x256xf32>,
    %c0_108 = arith.constant 0 : index
    %c80_109 = arith.constant 80 : index
    %128 = vector.load %arg7[%c0_108, %c80_109] : memref<4x768xf32, #tpu.memory_space<vmem>>, vector<4x256xf32>
    %c112_110 = arith.constant 112 : index
    %c0_111 = arith.constant 0 : index
    %129 = vector.load %arg8[%c112_110, %c0_111] : memref<144x256xf32, #tpu.memory_space<vmem>>, vector<4x256xf32>
    tpu.vector_store %arg8[%c112_110, %c0_111], %128 {strides = array<i32>} : memref<144x256xf32, #tpu.memory_space<vmem>>, vector<4x256xf32>,
    %c0_112 = arith.constant 0 : index
    %c91 = arith.constant 91 : index
    %130 = vector.load %arg7[%c0_112, %c91] : memref<4x768xf32, #tpu.memory_space<vmem>>, vector<4x256xf32>
    %c11 = arith.constant 11 : index
    %c0_113 = arith.constant 0 : index
    %131 = vector.load %arg5[%c11, %c0_113] : memref<12x256xf32, #tpu.memory_space<vmem>>, vector<1x256xf32>
    %132 = vector.broadcast %131 : vector<1x256xf32> to vector<4x256xf32>
    %133 = arith.mulf %130, %132 : vector<4x256xf32>
    %c116 = arith.constant 116 : index
    %c0_114 = arith.constant 0 : index
    %134 = vector.load %arg8[%c116, %c0_114] : memref<144x256xf32, #tpu.memory_space<vmem>>, vector<4x256xf32>
    tpu.vector_store %arg8[%c116, %c0_114], %133 {strides = array<i32>} : memref<144x256xf32, #tpu.memory_space<vmem>>, vector<4x256xf32>,
    %c0_115 = arith.constant 0 : index
    %c245 = arith.constant 245 : index
    %135 = vector.load %arg7[%c0_115, %c245] : memref<4x768xf32, #tpu.memory_space<vmem>>, vector<4x256xf32>
    %c9_116 = arith.constant 9 : index
    %c0_117 = arith.constant 0 : index
    %136 = vector.load %arg5[%c9_116, %c0_117] : memref<12x256xf32, #tpu.memory_space<vmem>>, vector<1x256xf32>
    %137 = vector.broadcast %136 : vector<1x256xf32> to vector<4x256xf32>
    %138 = arith.mulf %135, %137 : vector<4x256xf32>
    %c120 = arith.constant 120 : index
    %c0_118 = arith.constant 0 : index
    %139 = vector.load %arg8[%c120, %c0_118] : memref<144x256xf32, #tpu.memory_space<vmem>>, vector<4x256xf32>
    tpu.vector_store %arg8[%c120, %c0_118], %138 {strides = array<i32>} : memref<144x256xf32, #tpu.memory_space<vmem>>, vector<4x256xf32>,
    %c0_119 = arith.constant 0 : index
    %c256_120 = arith.constant 256 : index
    %140 = vector.load %arg7[%c0_119, %c256_120] : memref<4x768xf32, #tpu.memory_space<vmem>>, vector<4x256xf32>
    %c124 = arith.constant 124 : index
    %c0_121 = arith.constant 0 : index
    %141 = vector.load %arg8[%c124, %c0_121] : memref<144x256xf32, #tpu.memory_space<vmem>>, vector<4x256xf32>
    tpu.vector_store %arg8[%c124, %c0_121], %140 {strides = array<i32>} : memref<144x256xf32, #tpu.memory_space<vmem>>, vector<4x256xf32>,
    %c0_122 = arith.constant 0 : index
    %c267 = arith.constant 267 : index
    %142 = vector.load %arg7[%c0_122, %c267] : memref<4x768xf32, #tpu.memory_space<vmem>>, vector<4x256xf32>
    %c11_123 = arith.constant 11 : index
    %c0_124 = arith.constant 0 : index
    %143 = vector.load %arg5[%c11_123, %c0_124] : memref<12x256xf32, #tpu.memory_space<vmem>>, vector<1x256xf32>
    %144 = vector.broadcast %143 : vector<1x256xf32> to vector<4x256xf32>
    %145 = arith.mulf %142, %144 : vector<4x256xf32>
    %c128 = arith.constant 128 : index
    %c0_125 = arith.constant 0 : index
    %146 = vector.load %arg8[%c128, %c0_125] : memref<144x256xf32, #tpu.memory_space<vmem>>, vector<4x256xf32>
    tpu.vector_store %arg8[%c128, %c0_125], %145 {strides = array<i32>} : memref<144x256xf32, #tpu.memory_space<vmem>>, vector<4x256xf32>,
    %c0_126 = arith.constant 0 : index
    %c421 = arith.constant 421 : index
    %147 = vector.load %arg7[%c0_126, %c421] : memref<4x768xf32, #tpu.memory_space<vmem>>, vector<4x256xf32>
    %c9_127 = arith.constant 9 : index
    %c0_128 = arith.constant 0 : index
    %148 = vector.load %arg5[%c9_127, %c0_128] : memref<12x256xf32, #tpu.memory_space<vmem>>, vector<1x256xf32>
    %149 = vector.broadcast %148 : vector<1x256xf32> to vector<4x256xf32>
    %150 = arith.mulf %147, %149 : vector<4x256xf32>
    %c132 = arith.constant 132 : index
    %c0_129 = arith.constant 0 : index
    %151 = vector.load %arg8[%c132, %c0_129] : memref<144x256xf32, #tpu.memory_space<vmem>>, vector<4x256xf32>
    tpu.vector_store %arg8[%c132, %c0_129], %150 {strides = array<i32>} : memref<144x256xf32, #tpu.memory_space<vmem>>, vector<4x256xf32>,
    %c0_130 = arith.constant 0 : index
    %c432 = arith.constant 432 : index
    %152 = vector.load %arg7[%c0_130, %c432] : memref<4x768xf32, #tpu.memory_space<vmem>>, vector<4x256xf32>
    %c136 = arith.constant 136 : index
    %c0_131 = arith.constant 0 : index
    %153 = vector.load %arg8[%c136, %c0_131] : memref<144x256xf32, #tpu.memory_space<vmem>>, vector<4x256xf32>
    tpu.vector_store %arg8[%c136, %c0_131], %152 {strides = array<i32>} : memref<144x256xf32, #tpu.memory_space<vmem>>, vector<4x256xf32>,
    %c0_132 = arith.constant 0 : index
    %c443 = arith.constant 443 : index
    %154 = vector.load %arg7[%c0_132, %c443] : memref<4x768xf32, #tpu.memory_space<vmem>>, vector<4x256xf32>
    %c11_133 = arith.constant 11 : index
    %c0_134 = arith.constant 0 : index
    %155 = vector.load %arg5[%c11_133, %c0_134] : memref<12x256xf32, #tpu.memory_space<vmem>>, vector<1x256xf32>
    %156 = vector.broadcast %155 : vector<1x256xf32> to vector<4x256xf32>
    %157 = arith.mulf %154, %156 : vector<4x256xf32>
    %c140 = arith.constant 140 : index
    %c0_135 = arith.constant 0 : index
    %158 = vector.load %arg8[%c140, %c0_135] : memref<144x256xf32, #tpu.memory_space<vmem>>, vector<4x256xf32>
    tpu.vector_store %arg8[%c140, %c0_135], %157 {strides = array<i32>} : memref<144x256xf32, #tpu.memory_space<vmem>>, vector<4x256xf32>,
    %c0_136 = arith.constant 0 : index
    %c0_137 = arith.constant 0 : index
    %159 = vector.load %arg8[%c0_136, %c0_137] : memref<144x256xf32, #tpu.memory_space<vmem>>, vector<144x256xf32>
    %cst_138 = arith.constant dense<0.000000e+00> : vector<4x256xf32>
    %160 = tpu.matmul %2, %159, %cst_138 {dimension_numbers = #tpu.dot_dimension_numbers<[1], [0], [0], [1], [0, 0, 1, 1], [], []>} : vector<4x144xf32>, vector<144x256xf32>, vector<4x256xf32> -> vector<4x256xf32>
    %c0_139 = arith.constant 0 : index
    %c0_140 = arith.constant 0 : index
    %c0_141 = arith.constant 0 : index
    %161 = vector.load %arg6[%c0_139, %c0_140, %c0_141] : memref<1x4x256xf32, #tpu.memory_space<vmem>>, vector<1x4x256xf32>
    %162 = vector.shape_cast %161 : vector<1x4x256xf32> to vector<4x256xf32>
    %163 = vector.shape_cast %160 : vector<4x256xf32> to vector<1x4x256xf32>
    tpu.vector_store %arg6[%c0_139, %c0_140, %c0_141], %163 {strides = array<i32>} : memref<1x4x256xf32, #tpu.memory_space<vmem>>, vector<1x4x256xf32>,
    return
  }
  func.func @transform_0(%arg0: i32) -> (i32, i32, i32) {
    %c0_i32 = arith.constant 0 : i32
    %c0_i32_0 = arith.constant 0 : i32
    %c0_i32_1 = arith.constant 0 : i32
    return %arg0, %c0_i32, %c0_i32_0 : i32, i32, i32
  }
  func.func @transform_1(%arg0: i32) -> (i32, i32) {
    %c0_i32 = arith.constant 0 : i32
    %c0_i32_0 = arith.constant 0 : i32
    %c0_i32_1 = arith.constant 0 : i32
    return %c0_i32, %c0_i32_0 : i32, i32
  }
  func.func @transform_2(%arg0: i32) -> (i32, i32) {
    %c0_i32 = arith.constant 0 : i32
    %c0_i32_0 = arith.constant 0 : i32
    %c0_i32_1 = arith.constant 0 : i32
    return %c0_i32, %c0_i32_0 : i32, i32
  }
  func.func @transform_3(%arg0: i32) -> (i32, i32) {
    %c0_i32 = arith.constant 0 : i32
    %c0_i32_0 = arith.constant 0 : i32
    %c0_i32_1 = arith.constant 0 : i32
    return %c0_i32, %c0_i32_0 : i32, i32
  }
  func.func @transform_4(%arg0: i32) -> (i32, i32) {
    %c0_i32 = arith.constant 0 : i32
    %c0_i32_0 = arith.constant 0 : i32
    %c0_i32_1 = arith.constant 0 : i32
    return %c0_i32, %c0_i32_0 : i32, i32
  }
  func.func @transform_5(%arg0: i32) -> (i32, i32, i32) {
    %c0_i32 = arith.constant 0 : i32
    %c0_i32_0 = arith.constant 0 : i32
    %c0_i32_1 = arith.constant 0 : i32
    return %arg0, %c0_i32, %c0_i32_0 : i32, i32, i32
  }
}

</mosaic_0001>

<llo_original>
// kernel: quant_cdcm.1
$region0: #{quant_cdcm.1}
  #allocation0 [shape = 'u32[]', space=smem, size = 0x4, offset = 0x4, fixed_abs, tag = 'smem constant byte address 0x4 - core index']
  #allocation1 [shape = 'u32[144,128]{1,0:T(1,128)}', space=vmem, size = 0x12000, scoped, tag = 'internal scratch']
  #allocation2 [shape = 'f32[4,768]{1,0:T(4,128)}', space=vmem, size = 0x3000, scoped, tag = 'scratch operand']
  #allocation3 [shape = 'f32[144,256]{1,0:T(8,128)}', space=vmem, size = 0x24000, scoped, tag = 'scratch operand']
  %s0 = inlined_call_operand.vmem [shape: f32[2,8,256], index: 0, kind: input, shape index: {}]
  %s1 = inlined_call_operand.vmem [shape: f32[4,8], index: 1, kind: input, shape index: {}]
  %s2 = inlined_call_operand.vmem [shape: f32[4,1], index: 2, kind: input, shape index: {}]
  %s3 = inlined_call_operand.vmem [shape: f32[4,144], index: 3, kind: input, shape index: {}]
  %s4 = inlined_call_operand.vmem [shape: f32[12,256], index: 4, kind: input, shape index: {}]
  %s5 = inlined_call_operand.vmem [shape: f32[2,4,256], index: 5, kind: output, shape index: {}]
  %s6 = sld [smem:[#allocation0]]
  $region53: #{quant_cdcm.1} parent=0
    _
  %s8 = ssub.s32 1, %s6
  %s9 = scalar_select 0, %s8, %s6
  loop: start=0, step=1, limit=4
  $region2: #{quant_cdcm.1} parent=0 // loop_pre_header
    _
  $region3: #{quant_cdcm.1} parent=0 // loop_header
    %s11 = sphi 0, %s15
    %p12 = scmp.ge.s32.totalorder %s11, 4
    %s21 = sphi 0, %s23
    %s24 = sphi 0, %s21
    %s25 = sphi 0, %s24
    %s41 = sphi 0, %s25
    %s45 = sphi 0, %s45
    %s47 = sphi 0, %s45
    %s48 = sphi 0, %s47
    %s62 = sphi 0, %s48
    %s66 = sphi 0, %s66
    %s68 = sphi 0, %s66
    %s69 = sphi 0, %s68
    %s83 = sphi 0, %s69
    %s87 = sphi 0, %s87
    %s89 = sphi 0, %s87
    %s90 = sphi 0, %s89
    %s104 = sphi 0, %s90
    %s108 = sphi 0, %s108
    %s110 = sphi 0, %s108
    %s111 = sphi 0, %s110
    %s125 = sphi 0, %s111
    %s131 = sphi 0, %s133
    %s134 = sphi 0, %s131
    %s135 = sphi 0, %s134
    %s151 = sphi 0, %s135
  $region4: #{quant_cdcm.1} parent=0 // loop_header_branch
    %14 = sbr.rel (%p12) target = $region8
  $region5: #{quant_cdcm.1} parent=0 // loop_body
    %s16 = ssub.s32 %s11, 1
    %s17 = ssub.s32 %s11, 2
    %s18 = sadd.s32 %s11, 1
    %s19 = ssub.s32 %s11, %s18
    %p20 = scmp.eq.s32.totalorder %s19, 0
    %s22 = sadd.s32 %s21, 1
    %s23 = scalar_select %p20, %s21, %s22
    %p26 = pneg %p20
    %p27 = scmp.eq.s32.totalorder %s11, 1
    %p28 = por %p26, %p27
    %p29 = scmp.ne.s32.totalorder %s21, %s24
    %p30 = scmp.eq.s32.totalorder %s11, 0
    %p31 = por %p29, %p30
    %p32 = scmp.ne.s32.totalorder %s21, %s24
    %p33 = scmp.eq.s32.totalorder %s16, 1
    %p34 = por %p32, %p33
    %p35 = scmp.ne.s32.totalorder %s24, %s25
    %p36 = scmp.eq.s32.totalorder %s16, 0
    %p37 = por %p35, %p36
    %p38 = scmp.ne.s32.totalorder %s24, %s25
    %p39 = scmp.eq.s32.totalorder %s17, 1
    %p40 = por %p38, %p39
    %p42 = scmp.ne.s32.totalorder %s25, %s41
    %p43 = scmp.eq.s32.totalorder %s17, 0
    %p44 = por %p42, %p43
    %s46 = sadd.s32 %s45, 1
    %p49 = scmp.eq.s32.totalorder %s11, 1
    %p50 = scmp.ne.s32.totalorder %s45, %s47
    %p51 = scmp.eq.s32.totalorder %s11, 0
    %p52 = por %p50, %p51
    %p53 = scmp.ne.s32.totalorder %s45, %s47
    %p54 = scmp.eq.s32.totalorder %s16, 1
    %p55 = por %p53, %p54
    %p56 = scmp.ne.s32.totalorder %s47, %s48
    %p57 = scmp.eq.s32.totalorder %s16, 0
    %p58 = por %p56, %p57
    %p59 = scmp.ne.s32.totalorder %s47, %s48
    %p60 = scmp.eq.s32.totalorder %s17, 1
    %p61 = por %p59, %p60
    %p63 = scmp.ne.s32.totalorder %s48, %s62
    %p64 = scmp.eq.s32.totalorder %s17, 0
    %p65 = por %p63, %p64
    %s67 = sadd.s32 %s66, 1
    %p70 = scmp.eq.s32.totalorder %s11, 1
    %p71 = scmp.ne.s32.totalorder %s66, %s68
    %p72 = scmp.eq.s32.totalorder %s11, 0
    %p73 = por %p71, %p72
    %p74 = scmp.ne.s32.totalorder %s66, %s68
    %p75 = scmp.eq.s32.totalorder %s16, 1
    %p76 = por %p74, %p75
    %p77 = scmp.ne.s32.totalorder %s68, %s69
    %p78 = scmp.eq.s32.totalorder %s16, 0
    %p79 = por %p77, %p78
    %p80 = scmp.ne.s32.totalorder %s68, %s69
    %p81 = scmp.eq.s32.totalorder %s17, 1
    %p82 = por %p80, %p81
    %p84 = scmp.ne.s32.totalorder %s69, %s83
    %p85 = scmp.eq.s32.totalorder %s17, 0
    %p86 = por %p84, %p85
    %s88 = sadd.s32 %s87, 1
    %p91 = scmp.eq.s32.totalorder %s11, 1
    %p92 = scmp.ne.s32.totalorder %s87, %s89
    %p93 = scmp.eq.s32.totalorder %s11, 0
    %p94 = por %p92, %p93
    %p95 = scmp.ne.s32.totalorder %s87, %s89
    %p96 = scmp.eq.s32.totalorder %s16, 1
    %p97 = por %p95, %p96
    %p98 = scmp.ne.s32.totalorder %s89, %s90
    %p99 = scmp.eq.s32.totalorder %s16, 0
    %p100 = por %p98, %p99
    %p101 = scmp.ne.s32.totalorder %s89, %s90
    %p102 = scmp.eq.s32.totalorder %s17, 1
    %p103 = por %p101, %p102
    %p105 = scmp.ne.s32.totalorder %s90, %s104
    %p106 = scmp.eq.s32.totalorder %s17, 0
    %p107 = por %p105, %p106
    %s109 = sadd.s32 %s108, 1
    %p112 = scmp.eq.s32.totalorder %s11, 1
    %p113 = scmp.ne.s32.totalorder %s108, %s110
    %p114 = scmp.eq.s32.totalorder %s11, 0
    %p115 = por %p113, %p114
    %p116 = scmp.ne.s32.totalorder %s108, %s110
    %p117 = scmp.eq.s32.totalorder %s16, 1
    %p118 = por %p116, %p117
    %p119 = scmp.ne.s32.totalorder %s110, %s111
    %p120 = scmp.eq.s32.totalorder %s16, 0
    %p121 = por %p119, %p120
    %p122 = scmp.ne.s32.totalorder %s110, %s111
    %p123 = scmp.eq.s32.totalorder %s17, 1
    %p124 = por %p122, %p123
    %p126 = scmp.ne.s32.totalorder %s111, %s125
    %p127 = scmp.eq.s32.totalorder %s17, 0
    %p128 = por %p126, %p127
    %s129 = ssub.s32 %s11, %s18
    %p130 = scmp.eq.s32.totalorder %s129, 0
    %s132 = sadd.s32 %s131, 1
    %s133 = scalar_select %p130, %s131, %s132
    %p136 = pneg %p130
    %p137 = scmp.eq.s32.totalorder %s11, 1
    %p138 = por %p136, %p137
    %p139 = scmp.ne.s32.totalorder %s131, %s134
    %p140 = scmp.eq.s32.totalorder %s11, 0
    %p141 = por %p139, %p140
    %p142 = scmp.ne.s32.totalorder %s131, %s134
    %p143 = scmp.eq.s32.totalorder %s16, 1
    %p144 = por %p142, %p143
    %p145 = scmp.ne.s32.totalorder %s134, %s135
    %p146 = scmp.eq.s32.totalorder %s16, 0
    %p147 = por %p145, %p146
    %p148 = scmp.ne.s32.totalorder %s134, %s135
    %p149 = scmp.eq.s32.totalorder %s17, 1
    %p150 = por %p148, %p149
    %p152 = scmp.ne.s32.totalorder %s135, %s151
    %p153 = scmp.eq.s32.totalorder %s17, 0
    %p154 = por %p152, %p153
    %p155 = scmp.le.s32.totalorder 1, %s11
    %p156 = scmp.lt.s32.totalorder %s11, 3
    %p157 = pnand %p155, %p156
    %p158 = pneg %p157
    // Predicated region
    $region9: #{quant_cdcm.1} parent=5 // pred_check
      _
    $region10: #{quant_cdcm.1} parent=5 // pred_check_branch
      %160 = sbr.rel (%p157) target = $region12
    $region11: #{quant_cdcm.1} parent=5 // pred_region
      %s161 = ssub.s32 %s11, 1
      // Predicated region
      $region13: #{quant_cdcm.1} parent=11 // pred_check
        %p162 = pneg %p58
      $region14: #{quant_cdcm.1} parent=11 // pred_check_branch
        %164 = sbr.rel (%p162) target = $region16
      $region15: #{quant_cdcm.1} parent=11 // pred_region
        _
      $region16: #{quant_cdcm.1} parent=11 // pred_fallthru
        _
      // Predicated region
      $region17: #{quant_cdcm.1} parent=11 // pred_check
        %p165 = pneg %p79
      $region18: #{quant_cdcm.1} parent=11 // pred_check_branch
        %167 = sbr.rel (%p165) target = $region20
      $region19: #{quant_cdcm.1} parent=11 // pred_region
        _
      $region20: #{quant_cdcm.1} parent=11 // pred_fallthru
        _
      // Predicated region
      $region21: #{quant_cdcm.1} parent=11 // pred_check
        %p168 = pneg %p100
      $region22: #{quant_cdcm.1} parent=11 // pred_check_branch
        %170 = sbr.rel (%p168) target = $region24
      $region23: #{quant_cdcm.1} parent=11 // pred_region
        _
      $region24: #{quant_cdcm.1} parent=11 // pred_fallthru
        _
      // Predicated region
      $region25: #{quant_cdcm.1} parent=11 // pred_check
        %p171 = pneg %p121
      $region26: #{quant_cdcm.1} parent=11 // pred_check_branch
        %173 = sbr.rel (%p171) target = $region28
      $region27: #{quant_cdcm.1} parent=11 // pred_region
        _
      $region28: #{quant_cdcm.1} parent=11 // pred_fallthru
        _
    $region12: #{quant_cdcm.1} parent=5 // pred_fallthru
      _
    %p174 = scmp.lt.s32.totalorder %s11, 2
    // Predicated region
    $region29: #{quant_cdcm.1} parent=5 // pred_check
      %p175 = pneg %p174
    $region30: #{quant_cdcm.1} parent=5 // pred_check_branch
      %177 = sbr.rel (%p175) target = $region32
    $region31: #{quant_cdcm.1} parent=5 // pred_region
      // Predicated region
      $region33: #{quant_cdcm.1} parent=31 // pred_check
        %p178 = pneg %p31
      $region34: #{quant_cdcm.1} parent=31 // pred_check_branch
        %180 = sbr.rel (%p178) target = $region36
      $region35: #{quant_cdcm.1} parent=31 // pred_region
        %p181 = scmp.lt.s32.totalorder %s11, 1
        %s182 = scalar_select %p181, %s11, 1
        %s183 = smul.addr %s182, 2
        %s184 = smul.addr %s183, 8
        %s185 = scalar_lea.vmem %s0, %s184
      $region36: #{quant_cdcm.1} parent=31 // pred_fallthru
        _
    $region32: #{quant_cdcm.1} parent=5 // pred_fallthru
      _
    %p186 = scmp.le.s32.totalorder 1, %s11
    %p187 = scmp.lt.s32.totalorder %s11, 3
    %p188 = pnand %p186, %p187
    %p189 = pneg %p188
    // Predicated region
    $region37: #{quant_cdcm.1} parent=5 // pred_check
      _
    $region38: #{quant_cdcm.1} parent=5 // pred_check_branch
      %191 = sbr.rel (%p188) target = $region40
    $region39: #{quant_cdcm.1} parent=5 // pred_region
      %s192 = ssub.s32 %s11, 1
      %p193 = scmp.lt.s32.totalorder %s16, 1
      %s194 = scalar_select %p193, %s16, 1
      %s195 = smul.addr %s194, 2
      %s196 = smul.addr %s195, 8
      %s197 = scalar_lea.vmem %s0, %s196
      %p198 = pneg %p37
      %p199 = pneg %p34
      %p200 = pneg %p58
      %p201 = pneg %p55
      %p202 = pneg %p79
      %p203 = pneg %p76
      %p204 = pneg %p100
      %p205 = pneg %p97
      %p206 = pneg %p121
      %p207 = pneg %p118
      %p208 = pneg %p147
      %p209 = pneg %p144
      %p210 = scmp.lt.s32.totalorder %s16, 1
      %s211 = scalar_select %p210, %s16, 1
      %s212 = smul.addr %s211, 2
      %s213 = smul.addr %s212, 4
      %s214 = scalar_lea.vmem %s5, %s213
      %p215 = scmp.lt.s32.totalorder %s16, 1
      %s216 = scalar_select %p215, %s16, 1
      %s217 = smul.addr %s216, 2
      %s218 = smul.addr %s217, 8
      %s219 = scalar_lea.vmem %s0, %s218
      %p220 = scmp.lt.s32.totalorder %s16, 1
      %s221 = scalar_select %p220, %s16, 1
      %s222 = smul.addr %s221, 2
      %s223 = smul.addr %s222, 4
      %s224 = scalar_lea.vmem %s5, %s223
      %v225 = vld [vmem:[%s1] sm:$0xf]
      %v226 = vld [vmem:[%s2] sm:$0xf]
      %v227 = vld [vmem:[%s3] sm:$0xff]
      %228 = vst [vmem:[#allocation2] sm:$0xff] 0.0
      %229 = vst [vmem:[#allocation2 + $0x10] sm:$0xff] 0.0
      %v230 = vld [vmem:[%s219] sm:$0xff]
      %v231 = vld [vmem:[%s219 + $0x8] sm:$0xff]
      %v232 = vmax.f32 %v230, 0.0
      %v233 = vmax.f32 %v231, 0.0
      %235 = vset.pattern.permute.xlu0 0
      %236 = vperm.xlu0 %235, %v226
      %v237 = vpop.permute.xlu0 %236
      %vm239 = vcmask 64512
      %v241 = vsel %vm239, %v225, 0
      %243 = vmatprep.subr.mxu0 %v233
      %244 = vmatpush1.msra.mxu0 %v232
      %245 = vmatprep.subr.mxu0 0.0
      %246 = vmatpush1.msra.mxu0 0.0
      %247 = vmatprep.subr.mxu0 0.0
      %248 = vmatpush1.msra.mxu0 0.0
      %249 = vmatprep.subr.mxu0 0.0
      %250 = vmatpush1.msra.mxu0 0.0
      %251 = vmatprep.subr.mxu0 0.0
      %252 = vmatpush1.msra.mxu0 0.0
      %253 = vmatprep.subr.mxu0 0.0
      %254 = vmatpush1.msra.mxu0 0.0
      %255 = vmatprep.subr.mxu0 0.0
      %256 = vmatpush1.msra.mxu0 0.0
      %257 = vmatprep.subr.mxu0 0.0
      %258 = vmatpush1.msra.mxu0 0.0
      %259 = vmatprep.subr.mxu0 0.0
      %260 = vmatpush1.msra.mxu0 0.0
      %261 = vmatprep.subr.mxu0 0.0
      %262 = vmatpush1.msra.mxu0 0.0
      %263 = vmatprep.subr.mxu0 0.0
      %264 = vmatpush1.msra.mxu0 0.0
      %265 = vmatprep.subr.mxu0 0.0
      %266 = vmatpush1.msra.mxu0 0.0
      %267 = vmatprep.subr.mxu0 0.0
      %268 = vmatpush1.msra.mxu0 0.0
      %269 = vmatprep.subr.mxu0 0.0
      %270 = vmatpush1.msra.mxu0 0.0
      %271 = vmatprep.subr.mxu0 0.0
      %272 = vmatpush1.msra.mxu0 0.0
      %273 = vmatprep.subr.mxu0 0.0
      %274 = vmatpush1.msra.mxu0 0.0
      %275 = vmatprep.subr.mxu0 0.0
      %276 = vmatpush1.msra.mxu0 0.0
      %277 = vmatprep.subr.mxu0 0.0
      %278 = vmatpush1.msra.mxu0 0.0
      %279 = vmatprep.subr.mxu0 0.0
      %280 = vmatpush1.msra.mxu0 0.0
      %281 = vmatprep.subr.mxu0 0.0
      %282 = vmatpush1.msra.mxu0 0.0
      %283 = vmatprep.subr.mxu0 0.0
      %284 = vmatpush1.msra.mxu0 0.0
      %285 = vmatprep.subr.mxu0 0.0
      %286 = vmatpush1.msra.mxu0 0.0
      %287 = vmatprep.subr.mxu0 0.0
      %288 = vmatpush1.msra.mxu0 0.0
      %289 = vmatprep.subr.mxu0 0.0
      %290 = vmatpush1.msra.mxu0 0.0
      %291 = vmatprep.subr.mxu0 0.0
      %292 = vmatpush1.msra.mxu0 0.0
      %293 = vmatprep.subr.mxu0 0.0
      %294 = vmatpush1.msra.mxu0 0.0
      %295 = vmatprep.subr.mxu0 0.0
      %296 = vmatpush1.msra.mxu0 0.0
      %297 = vmatprep.subr.mxu0 0.0
      %298 = vmatpush1.msra.mxu0 0.0
      %299 = vmatprep.subr.mxu0 0.0
      %300 = vmatpush1.msra.mxu0 0.0
      %301 = vmatprep.subr.mxu0 0.0
      %302 = vmatpush1.msra.mxu0 0.0
      %303 = vmatprep.subr.mxu0 0.0
      %304 = vmatpush1.msra.mxu0 0.0
      %305 = vmatprep.subr.mxu0 0.0
      %306 = vmatpush1.msra.mxu0 0.0
      %307 = vmatprep.mubr.f32.mxu0 0.0
      %308 = vmatmul.mubr.f32.gmra.mrb[0].mxu0 %v241
      %v309 = vpop.f32.mrb[0].mxu0
      %v310 = vadd.f32 %v237, %v309
      %v311 = vpop.f32.mrb[0].mxu0
      %v312 = vadd.f32 %v237, %v311
      %313 = vdwg.mxu0
      %v316 = vcombine.low %v310, %v312
      %318 = vst [vmem:[#allocation2 + $0x8] sm:$0xff] %v316
      %v319 = vld [vmem:[#allocation2 + $0x4] sm:$0xff]
      %v320 = vld [vmem:[#allocation2 + $0xc] sm:$0xf]
      %v321 = vld [vmem:[%s4] ss:$8 sm:$0x3]
      %v323 = vlaneseq
      %v324 = vshrl.u32 %v323, 7
      %v325 = vsub.s32 0, %v324
      %v326 = vrot.slane %v321, %v325
      %v327 = vlaneseq
      %v328 = vshrl.u32 %v327, 7
      %v329 = vsub.s32 1, %v328
      %v330 = vrot.slane %v321, %v329
      %v331 = vcombine.low %v326, %v330
      %332 = vrot.lane.b32.xlu0 %v331, 43
      %v333 = vpop.permute.xlu0 %332
      %v334 = vrot.slane %v333, 4
      %vm335 = vcmask 351232
      %v336 = vsel %vm335, %v334, %v333
      %v339 = vmul.f32 %v319, %v336
      %v340 = vmul.f32 %v320, %v334
      %v343 = vcombine.high %v339, %v339
      %344 = vrot.lane.b32.xlu0 %v339, 85
      %v345 = vpop.permute.xlu0 %344
      %346 = vrot.lane.b32.xlu0 %v343, 85
      %v347 = vpop.permute.xlu0 %346
      %348 = vrot.lane.b32.xlu0 %v340, 85
      %v349 = vpop.permute.xlu0 %348
      %vm350 = vcmask 695296
      %v351 = vsel %vm350, %v345, %v347
      %v352 = vsel %vm350, %v347, %v349
      %355 = vst [vmem:[#allocation3] sm:$0xf] %v351
      %356 = vst [vmem:[#allocation3 + $0x8] sm:$0xf] %v352
      %v357 = vld [vmem:[#allocation2 + $0x4] sm:$0xff]
      %v358 = vld [vmem:[#allocation2 + $0xc] sm:$0xf]
      %v361 = vcombine.low %v357, %v357
      %v362 = vcombine.low %v358, %v358
      %363 = vrot.lane.b32.xlu0 %v361, 80
      %v364 = vpop.permute.xlu0 %363
      %365 = vrot.lane.b32.xlu0 %v357, 80
      %v366 = vpop.permute.xlu0 %365
      %367 = vrot.lane.b32.xlu0 %v362, 80
      %v368 = vpop.permute.xlu0 %367
      %vm369 = vcmask 654336
      %v370 = vsel %vm369, %v364, %v366
      %v371 = vsel %vm369, %v366, %v368
      %374 = vst [vmem:[#allocation3] sm:$0xf0] %v370
      %375 = vst [vmem:[#allocation3 + $0x8] sm:$0xf0] %v371
      %v376 = vld [vmem:[#allocation2 + $0x4] sm:$0xff]
      %v377 = vld [vmem:[#allocation2 + $0xc] sm:$0xf]
      %s378 = scalar_lea.vmem %s4, 2
      %v379 = vld [vmem:[%s378] ss:$8 sm:$0x3]
      %v381 = vlaneseq
      %v382 = vshrl.u32 %v381, 7
      %v383 = vsub.s32 0, %v382
      %v384 = vrot.slane %v379, %v383
      %v385 = vlaneseq
      %v386 = vshrl.u32 %v385, 7
      %v387 = vsub.s32 1, %v386
      %v388 = vrot.slane %v379, %v387
      %v389 = vcombine.low %v384, %v388
      %390 = vrot.lane.b32.xlu0 %v389, 53
      %v391 = vpop.permute.xlu0 %390
      %v392 = vrot.slane %v391, 4
      %vm393 = vcmask 433152
      %v394 = vsel %vm393, %v392, %v391
      %v397 = vmul.f32 %v376, %v394
      %v398 = vmul.f32 %v377, %v392
      %v401 = vcombine.high %v397, %v397
      %402 = vrot.lane.b32.xlu0 %v397, 75
      %v403 = vpop.permute.xlu0 %402
      %404 = vrot.lane.b32.xlu0 %v401, 75
      %v405 = vpop.permute.xlu0 %404
      %406 = vrot.lane.b32.xlu0 %v398, 75
      %v407 = vpop.permute.xlu0 %406
      %vm408 = vcmask 613376
      %v409 = vsel %vm408, %v403, %v405
      %v410 = vsel %vm408, %v405, %v407
      %413 = vst [vmem:[#allocation3 + $0x10] sm:$0xf] %v409
      %414 = vst [vmem:[#allocation3 + $0x18] sm:$0xf] %v410
      %v415 = vld [vmem:[#allocation2 + $0x4] sm:$0xff]
      %v416 = vld [vmem:[#allocation2 + $0xc] sm:$0xf]
      %v417 = vld [vmem:[%s4] ss:$8 sm:$0x3]
      %v419 = vlaneseq
      %v420 = vshrl.u32 %v419, 7
      %v421 = vsub.s32 0, %v420
      %v422 = vrot.slane %v417, %v421
      %v423 = vlaneseq
      %v424 = vshrl.u32 %v423, 7
      %v425 = vsub.s32 1, %v424
      %v426 = vrot.slane %v417, %v425
      %v427 = vcombine.low %v422, %v426
      %428 = vrot.lane.b32.xlu0 %v427, 123
      %v429 = vpop.permute.xlu0 %428
      %v430 = vrot.slane %v429, 4
      %vm431 = vcmask 1006592
      %v432 = vsel %vm431, %v430, %v429
      %v435 = vmul.f32 %v415, %v432
      %v436 = vmul.f32 %v416, %v430
      %v439 = vcombine.low %v435, %v435
      %v440 = vcombine.low %v436, %v436
      %441 = vrot.lane.b32.xlu0 %v439, 5
      %v442 = vpop.permute.xlu0 %441
      %443 = vrot.lane.b32.xlu0 %v435, 5
      %v444 = vpop.permute.xlu0 %443
      %445 = vrot.lane.b32.xlu0 %v440, 5
      %v446 = vpop.permute.xlu0 %445
      %vm447 = vcmask 39936
      %v448 = vsel %vm447, %v442, %v444
      %v449 = vsel %vm447, %v444, %v446
      %452 = vst [vmem:[#allocation3 + $0x10] sm:$0xf0] %v448
      %453 = vst [vmem:[#allocation3 + $0x18] sm:$0xf0] %v449
      %v454 = vld [vmem:[#allocation2 + $0x8] sm:$0xff]
      %v456 = vcombine.high %v454, %v454
      %458 = vst [vmem:[#allocation3 + $0x20] sm:$0xf] %v454
      %459 = vst [vmem:[#allocation3 + $0x28] sm:$0xf] %v456
      %v460 = vld [vmem:[#allocation2 + $0x8] sm:$0xff]
      %v461 = vld [vmem:[#allocation2 + $0x10] sm:$0xf]
      %v462 = vld [vmem:[%s378] ss:$8 sm:$0x3]
      %v464 = vlaneseq
      %v465 = vshrl.u32 %v464, 7
      %v466 = vsub.s32 0, %v465
      %v467 = vrot.slane %v462, %v466
      %v468 = vlaneseq
      %v469 = vshrl.u32 %v468, 7
      %v470 = vsub.s32 1, %v469
      %v471 = vrot.slane %v462, %v470
      %v472 = vcombine.low %v467, %v471
      %473 = vrot.lane.b32.xlu0 %v472, 5
      %v474 = vpop.permute.xlu0 %473
      %v475 = vrot.slane %v474, 4
      %v476 = vsel %vm447, %v475, %v474
      %v479 = vmul.f32 %v460, %v476
      %v480 = vmul.f32 %v461, %v475
      %v483 = vcombine.low %v479, %v479
      %v484 = vcombine.low %v480, %v480
      %485 = vrot.lane.b32.xlu0 %v483, 123
      %v486 = vpop.permute.xlu0 %485
      %487 = vrot.lane.b32.xlu0 %v479, 123
      %v488 = vpop.permute.xlu0 %487
      %489 = vrot.lane.b32.xlu0 %v484, 123
      %v490 = vpop.permute.xlu0 %489
      %v491 = vsel %vm431, %v486, %v488
      %v492 = vsel %vm431, %v488, %v490
      %495 = vst [vmem:[#allocation3 + $0x20] sm:$0xf0] %v491
      %496 = vst [vmem:[#allocation3 + $0x28] sm:$0xf0] %v492
      %v497 = vld [vmem:[#allocation2 + $0x8] sm:$0xff]
      %v498 = vld [vmem:[#allocation2 + $0x10] sm:$0xf]
      %v499 = vld [vmem:[%s4] ss:$8 sm:$0x3]
      %v501 = vlaneseq
      %v502 = vshrl.u32 %v501, 7
      %v503 = vsub.s32 0, %v502
      %v504 = vrot.slane %v499, %v503
      %v505 = vlaneseq
      %v506 = vshrl.u32 %v505, 7
      %v507 = vsub.s32 1, %v506
      %v508 = vrot.slane %v499, %v507
      %v509 = vcombine.low %v504, %v508
      %510 = vrot.lane.b32.xlu0 %v509, 75
      %v511 = vpop.permute.xlu0 %510
      %v512 = vrot.slane %v511, 4
      %v513 = vsel %vm408, %v512, %v511
      %v516 = vmul.f32 %v497, %v513
      %v517 = vmul.f32 %v498, %v512
      %v520 = vcombine.high %v516, %v516
      %521 = vrot.lane.b32.xlu0 %v516, 53
      %v522 = vpop.permute.xlu0 %521
      %523 = vrot.lane.b32.xlu0 %v520, 53
      %v524 = vpop.permute.xlu0 %523
      %525 = vrot.lane.b32.xlu0 %v517, 53
      %v526 = vpop.permute.xlu0 %525
      %v527 = vsel %vm393, %v522, %v524
      %v528 = vsel %vm393, %v524, %v526
      %531 = vst [vmem:[#allocation3 + $0x30] sm:$0xf] %v527
      %532 = vst [vmem:[#allocation3 + $0x38] sm:$0xf] %v528
      %v533 = vld [vmem:[#allocation2 + $0x8] sm:$0xff]
      %v534 = vld [vmem:[#allocation2 + $0x10] sm:$0xf]
      %v537 = vcombine.low %v533, %v533
      %v538 = vcombine.low %v534, %v534
      %539 = vrot.lane.b32.xlu0 %v537, 48
      %v540 = vpop.permute.xlu0 %539
      %541 = vrot.lane.b32.xlu0 %v533, 48
      %v542 = vpop.permute.xlu0 %541
      %543 = vrot.lane.b32.xlu0 %v538, 48
      %v544 = vpop.permute.xlu0 %543
      %vm545 = vcmask 392192
      %v546 = vsel %vm545, %v540, %v542
      %v547 = vsel %vm545, %v542, %v544
      %550 = vst [vmem:[#allocation3 + $0x30] sm:$0xf0] %v546
      %551 = vst [vmem:[#allocation3 + $0x38] sm:$0xf0] %v547
      %v552 = vld [vmem:[#allocation2 + $0x8] sm:$0xff]
      %v553 = vld [vmem:[#allocation2 + $0x10] sm:$0xf]
      %v554 = vld [vmem:[%s378] ss:$8 sm:$0x3]
      %v556 = vlaneseq
      %v557 = vshrl.u32 %v556, 7
      %v558 = vsub.s32 0, %v557
      %v559 = vrot.slane %v554, %v558
      %v560 = vlaneseq
      %v561 = vshrl.u32 %v560, 7
      %v562 = vsub.s32 1, %v561
      %v563 = vrot.slane %v554, %v562
      %v564 = vcombine.low %v559, %v563
      %565 = vrot.lane.b32.xlu0 %v564, 85
      %v566 = vpop.permute.xlu0 %565
      %v567 = vrot.slane %v566, 4
      %v568 = vsel %vm350, %v567, %v566
      %v571 = vmul.f32 %v552, %v568
      %v572 = vmul.f32 %v553, %v567
      %v575 = vcombine.high %v571, %v571
      %576 = vrot.lane.b32.xlu0 %v571, 43
      %v577 = vpop.permute.xlu0 %576
      %578 = vrot.lane.b32.xlu0 %v575, 43
      %v579 = vpop.permute.xlu0 %578
      %580 = vrot.lane.b32.xlu0 %v572, 43
      %v581 = vpop.permute.xlu0 %580
      %v582 = vsel %vm335, %v577, %v579
      %v583 = vsel %vm335, %v579, %v581
      %586 = vst [vmem:[#allocation3 + $0x40] sm:$0xf] %v582
      %587 = vst [vmem:[#allocation3 + $0x48] sm:$0xf] %v583
      %v588 = vld [vmem:[#allocation2 + $0x4] sm:$0xff]
      %v589 = vld [vmem:[#allocation2 + $0xc] sm:$0xf]
      %s590 = scalar_lea.vmem %s4, 3
      %v591 = vld [vmem:[%s590] ss:$8 sm:$0x3]
      %v593 = vlaneseq
      %v594 = vshrl.u32 %v593, 7
      %v595 = vsub.s32 0, %v594
      %v596 = vrot.slane %v591, %v595
      %v597 = vlaneseq
      %v598 = vshrl.u32 %v597, 7
      %v599 = vsub.s32 1, %v598
      %v600 = vrot.slane %v591, %v599
      %v601 = vcombine.low %v596, %v600
      %602 = vrot.lane.b32.xlu0 %v601, 9
      %v603 = vpop.permute.xlu0 %602
      %v604 = vrot.slane %v603, 4
      %vm605 = vcmask 72704
      %v606 = vsel %vm605, %v604, %v603
      %v609 = vmul.f32 %v588, %v606
      %v610 = vmul.f32 %v589, %v604
      %v613 = vcombine.low %v609, %v609
      %v614 = vcombine.low %v610, %v610
      %615 = vrot.lane.b32.xlu0 %v613, 119
      %v616 = vpop.permute.xlu0 %615
      %617 = vrot.lane.b32.xlu0 %v609, 119
      %v618 = vpop.permute.xlu0 %617
      %619 = vrot.lane.b32.xlu0 %v614, 119
      %v620 = vpop.permute.xlu0 %619
      %vm621 = vcmask 973824
      %v622 = vsel %vm621, %v616, %v618
      %v623 = vsel %vm621, %v618, %v620
      %626 = vst [vmem:[#allocation3 + $0x40] sm:$0xf0] %v622
      %627 = vst [vmem:[#allocation3 + $0x48] sm:$0xf0] %v623
      %v628 = vld [vmem:[#allocation2 + $0x4] sm:$0xff]
      %v629 = vld [vmem:[#allocation2 + $0xc] sm:$0xf]
      %v632 = vcombine.high %v628, %v628
      %633 = vrot.lane.b32.xlu0 %v628, 112
      %v634 = vpop.permute.xlu0 %633
      %635 = vrot.lane.b32.xlu0 %v632, 112
      %v636 = vpop.permute.xlu0 %635
      %637 = vrot.lane.b32.xlu0 %v629, 112
      %v638 = vpop.permute.xlu0 %637
      %vm639 = vcmask 916480
      %v640 = vsel %vm639, %v634, %v636
      %v641 = vsel %vm639, %v636, %v638
      %644 = vst [vmem:[#allocation3 + $0x50] sm:$0xf] %v640
      %645 = vst [vmem:[#allocation3 + $0x58] sm:$0xf] %v641
      %v646 = vld [vmem:[#allocation2 + $0x4] sm:$0xff]
      %v647 = vld [vmem:[#allocation2 + $0xc] sm:$0xf]
      %s648 = scalar_lea.vmem %s4, 5
      %v649 = vld [vmem:[%s648] ss:$8 sm:$0x3]
      %v651 = vlaneseq
      %v652 = vshrl.u32 %v651, 7
      %v653 = vsub.s32 0, %v652
      %v654 = vrot.slane %v649, %v653
      %v655 = vlaneseq
      %v656 = vshrl.u32 %v655, 7
      %v657 = vsub.s32 1, %v656
      %v658 = vrot.slane %v649, %v657
      %v659 = vcombine.low %v654, %v658
      %660 = vrot.lane.b32.xlu0 %v659, 23
      %v661 = vpop.permute.xlu0 %660
      %v662 = vrot.slane %v661, 4
      %vm663 = vcmask 187392
      %v664 = vsel %vm663, %v662, %v661
      %v667 = vmul.f32 %v646, %v664
      %v668 = vmul.f32 %v647, %v662
      %v671 = vcombine.low %v667, %v667
      %v672 = vcombine.low %v668, %v668
      %673 = vrot.lane.b32.xlu0 %v671, 105
      %v674 = vpop.permute.xlu0 %673
      %675 = vrot.lane.b32.xlu0 %v667, 105
      %v676 = vpop.permute.xlu0 %675
      %677 = vrot.lane.b32.xlu0 %v672, 105
      %v678 = vpop.permute.xlu0 %677
      %vm679 = vcmask 859136
      %v680 = vsel %vm679, %v674, %v676
      %v681 = vsel %vm679, %v676, %v678
      %684 = vst [vmem:[#allocation3 + $0x50] sm:$0xf0] %v680
      %685 = vst [vmem:[#allocation3 + $0x58] sm:$0xf0] %v681
      %v686 = vld [vmem:[#allocation2 + $0x4] sm:$0xff]
      %v687 = vld [vmem:[#allocation2 + $0xc] sm:$0xf]
      %v688 = vld [vmem:[%s590] ss:$8 sm:$0x3]
      %v690 = vlaneseq
      %v691 = vshrl.u32 %v690, 7
      %v692 = vsub.s32 0, %v691
      %v693 = vrot.slane %v688, %v692
      %v694 = vlaneseq
      %v695 = vshrl.u32 %v694, 7
      %v696 = vsub.s32 1, %v695
      %v697 = vrot.slane %v688, %v696
      %v698 = vcombine.low %v693, %v697
      %699 = vrot.lane.b32.xlu0 %v698, 121
      %v700 = vpop.permute.xlu0 %699
      %v701 = vrot.slane %v700, 4
      %vm702 = vcmask 990208
      %v703 = vsel %vm702, %v701, %v700
      %v706 = vmul.f32 %v686, %v703
      %v707 = vmul.f32 %v687, %v701
      %v710 = vcombine.high %v706, %v706
      %711 = vrot.lane.b32.xlu0 %v706, 7
      %v712 = vpop.permute.xlu0 %711
      %713 = vrot.lane.b32.xlu0 %v710, 7
      %v714 = vpop.permute.xlu0 %713
      %715 = vrot.lane.b32.xlu0 %v707, 7
      %v716 = vpop.permute.xlu0 %715
      %vm717 = vcmask 56320
      %v718 = vsel %vm717, %v712, %v714
      %v719 = vsel %vm717, %v714, %v716
      %722 = vst [vmem:[#allocation3 + $0x60] sm:$0xf] %v718
      %723 = vst [vmem:[#allocation3 + $0x68] sm:$0xf] %v719
      %v724 = vld [vmem:[#allocation2 + $0x8] sm:$0xff]
      %v726 = vcombine.low %v724, %v724
      %728 = vst [vmem:[#allocation3 + $0x60] sm:$0xf0] %v726
      %729 = vst [vmem:[#allocation3 + $0x68] sm:$0xf0] %v724
      %v730 = vld [vmem:[#allocation2 + $0x8] sm:$0xff]
      %v731 = vld [vmem:[#allocation2 + $0x10] sm:$0xf]
      %v732 = vld [vmem:[%s648] ss:$8 sm:$0x3]
      %v734 = vlaneseq
      %v735 = vshrl.u32 %v734, 7
      %v736 = vsub.s32 0, %v735
      %v737 = vrot.slane %v732, %v736
      %v738 = vlaneseq
      %v739 = vshrl.u32 %v738, 7
      %v740 = vsub.s32 1, %v739
      %v741 = vrot.slane %v732, %v740
      %v742 = vcombine.low %v737, %v741
      %743 = vrot.lane.b32.xlu0 %v742, 7
      %v744 = vpop.permute.xlu0 %743
      %v745 = vrot.slane %v744, 4
      %v746 = vsel %vm717, %v745, %v744
      %v749 = vmul.f32 %v730, %v746
      %v750 = vmul.f32 %v731, %v745
      %v753 = vcombine.high %v749, %v749
      %754 = vrot.lane.b32.xlu0 %v749, 121
      %v755 = vpop.permute.xlu0 %754
      %756 = vrot.lane.b32.xlu0 %v753, 121
      %v757 = vpop.permute.xlu0 %756
      %758 = vrot.lane.b32.xlu0 %v750, 121
      %v759 = vpop.permute.xlu0 %758
      %v760 = vsel %vm702, %v755, %v757
      %v761 = vsel %vm702, %v757, %v759
      %764 = vst [vmem:[#allocation3 + $0x70] sm:$0xf] %v760
      %765 = vst [vmem:[#allocation3 + $0x78] sm:$0xf] %v761
      %v766 = vld [vmem:[#allocation2 + $0x8] sm:$0xff]
      %v767 = vld [vmem:[#allocation2 + $0x10] sm:$0xf]
      %v768 = vld [vmem:[%s590] ss:$8 sm:$0x3]
      %v770 = vlaneseq
      %v771 = vshrl.u32 %v770, 7
      %v772 = vsub.s32 0, %v771
      %v773 = vrot.slane %v768, %v772
      %v774 = vlaneseq
      %v775 = vshrl.u32 %v774, 7
      %v776 = vsub.s32 1, %v775
      %v777 = vrot.slane %v768, %v776
      %v778 = vcombine.low %v773, %v777
      %779 = vrot.lane.b32.xlu0 %v778, 105
      %v780 = vpop.permute.xlu0 %779
      %v781 = vrot.slane %v780, 4
      %v782 = vsel %vm679, %v781, %v780
      %v785 = vmul.f32 %v766, %v782
      %v786 = vmul.f32 %v767, %v781
      %v789 = vcombine.low %v785, %v785
      %v790 = vcombine.low %v786, %v786
      %791 = vrot.lane.b32.xlu0 %v789, 23
      %v792 = vpop.permute.xlu0 %791
      %793 = vrot.lane.b32.xlu0 %v785, 23
      %v794 = vpop.permute.xlu0 %793
      %795 = vrot.lane.b32.xlu0 %v790, 23
      %v796 = vpop.permute.xlu0 %795
      %v797 = vsel %vm663, %v792, %v794
      %v798 = vsel %vm663, %v794, %v796
      %801 = vst [vmem:[#allocation3 + $0x70] sm:$0xf0] %v797
      %802 = vst [vmem:[#allocation3 + $0x78] sm:$0xf0] %v798
      %v803 = vld [vmem:[#allocation2 + $0x8] sm:$0xff]
      %v804 = vld [vmem:[#allocation2 + $0x10] sm:$0xf]
      %v807 = vcombine.high %v803, %v803
      %808 = vrot.lane.b32.xlu0 %v803, 16
      %v809 = vpop.permute.xlu0 %808
      %810 = vrot.lane.b32.xlu0 %v807, 16
      %v811 = vpop.permute.xlu0 %810
      %812 = vrot.lane.b32.xlu0 %v804, 16
      %v813 = vpop.permute.xlu0 %812
      %vm814 = vcmask 130048
      %v815 = vsel %vm814, %v809, %v811
      %v816 = vsel %vm814, %v811, %v813
      %819 = vst [vmem:[#allocation3 + $0x80] sm:$0xf] %v815
      %820 = vst [vmem:[#allocation3 + $0x88] sm:$0xf] %v816
      %v821 = vld [vmem:[#allocation2 + $0x8] sm:$0xff]
      %v822 = vld [vmem:[#allocation2 + $0x10] sm:$0xf]
      %v823 = vld [vmem:[%s648] ss:$8 sm:$0x3]
      %v825 = vlaneseq
      %v826 = vshrl.u32 %v825, 7
      %v827 = vsub.s32 0, %v826
      %v828 = vrot.slane %v823, %v827
      %v829 = vlaneseq
      %v830 = vshrl.u32 %v829, 7
      %v831 = vsub.s32 1, %v830
      %v832 = vrot.slane %v823, %v831
      %v833 = vcombine.low %v828, %v832
      %834 = vrot.lane.b32.xlu0 %v833, 119
      %v835 = vpop.permute.xlu0 %834
      %v836 = vrot.slane %v835, 4
      %v837 = vsel %vm621, %v836, %v835
      %v840 = vmul.f32 %v821, %v837
      %v841 = vmul.f32 %v822, %v836
      %v844 = vcombine.low %v840, %v840
      %v845 = vcombine.low %v841, %v841
      %846 = vrot.lane.b32.xlu0 %v844, 9
      %v847 = vpop.permute.xlu0 %846
      %848 = vrot.lane.b32.xlu0 %v840, 9
      %v849 = vpop.permute.xlu0 %848
      %850 = vrot.lane.b32.xlu0 %v845, 9
      %v851 = vpop.permute.xlu0 %850
      %v852 = vsel %vm605, %v847, %v849
      %v853 = vsel %vm605, %v849, %v851
      %856 = vst [vmem:[#allocation3 + $0x80] sm:$0xf0] %v852
      %857 = vst [vmem:[#allocation3 + $0x88] sm:$0xf0] %v853
      %v858 = vld [vmem:[#allocation2] sm:$0xff]
      %v859 = vld [vmem:[#allocation2 + $0x8] sm:$0xf]
      %s860 = scalar_lea.vmem %s4, 6
      %v861 = vld [vmem:[%s860] ss:$8 sm:$0x3]
      %v863 = vlaneseq
      %v864 = vshrl.u32 %v863, 7
      %v865 = vsub.s32 0, %v864
      %v866 = vrot.slane %v861, %v865
      %v867 = vlaneseq
      %v868 = vshrl.u32 %v867, 7
      %v869 = vsub.s32 1, %v868
      %v870 = vrot.slane %v861, %v869
      %v871 = vcombine.low %v866, %v870
      %872 = vrot.lane.b32.xlu0 %v871, 103
      %v873 = vpop.permute.xlu0 %872
      %v874 = vrot.slane %v873, 4
      %vm875 = vcmask 842752
      %v876 = vsel %vm875, %v874, %v873
      %v879 = vmul.f32 %v858, %v876
      %v880 = vmul.f32 %v859, %v874
      %v883 = vcombine.high %v879, %v879
      %884 = vrot.lane.b32.xlu0 %v879, 25
      %v885 = vpop.permute.xlu0 %884
      %886 = vrot.lane.b32.xlu0 %v883, 25
      %v887 = vpop.permute.xlu0 %886
      %888 = vrot.lane.b32.xlu0 %v880, 25
      %v889 = vpop.permute.xlu0 %888
      %vm890 = vcmask 203776
      %v891 = vsel %vm890, %v885, %v887
      %v892 = vsel %vm890, %v887, %v889
      %895 = vst [vmem:[#allocation3 + $0x90] sm:$0xf] %v891
      %896 = vst [vmem:[#allocation3 + $0x98] sm:$0xf] %v892
      %v897 = vld [vmem:[#allocation2] sm:$0xff]
      %v898 = vld [vmem:[#allocation2 + $0x8] sm:$0xf]
      %v901 = vcombine.low %v897, %v897
      %v902 = vcombine.low %v898, %v898
      %903 = vrot.lane.b32.xlu0 %v901, 16
      %v904 = vpop.permute.xlu0 %903
      %905 = vrot.lane.b32.xlu0 %v897, 16
      %v906 = vpop.permute.xlu0 %905
      %907 = vrot.lane.b32.xlu0 %v902, 16
      %v908 = vpop.permute.xlu0 %907
      %v909 = vsel %vm814, %v904, %v906
      %v910 = vsel %vm814, %v906, %v908
      %913 = vst [vmem:[#allocation3 + $0x90] sm:$0xf0] %v909
      %914 = vst [vmem:[#allocation3 + $0x98] sm:$0xf0] %v910
      %v915 = vld [vmem:[#allocation2] sm:$0xff]
      %v916 = vld [vmem:[#allocation2 + $0x8] sm:$0xf]
      %s917 = scalar_lea.vmem %s4, 16
      %v918 = vld [vmem:[%s917] ss:$8 sm:$0x3]
      %v920 = vlaneseq
      %v921 = vshrl.u32 %v920, 7
      %v922 = vsub.s32 0, %v921
      %v923 = vrot.slane %v918, %v922
      %v924 = vlaneseq
      %v925 = vshrl.u32 %v924, 7
      %v926 = vsub.s32 1, %v925
      %v927 = vrot.slane %v918, %v926
      %v928 = vcombine.low %v923, %v927
      %929 = vrot.lane.b32.xlu0 %v928, 121
      %v930 = vpop.permute.xlu0 %929
      %v931 = vrot.slane %v930, 4
      %v932 = vsel %vm702, %v931, %v930
      %v935 = vmul.f32 %v915, %v932
      %v936 = vmul.f32 %v916, %v931
      %v939 = vcombine.high %v935, %v935
      %940 = vrot.lane.b32.xlu0 %v935, 7
      %v941 = vpop.permute.xlu0 %940
      %942 = vrot.lane.b32.xlu0 %v939, 7
      %v943 = vpop.permute.xlu0 %942
      %944 = vrot.lane.b32.xlu0 %v936, 7
      %v945 = vpop.permute.xlu0 %944
      %v946 = vsel %vm717, %v941, %v943
      %v947 = vsel %vm717, %v943, %v945
      %950 = vst [vmem:[#allocation3 + $0xa0] sm:$0xf] %v946
      %951 = vst [vmem:[#allocation3 + $0xa8] sm:$0xf] %v947
      %v952 = vld [vmem:[#allocation2 + $0x4] sm:$0xff]
      %v953 = vld [vmem:[#allocation2 + $0xc] sm:$0xf]
      %v954 = vld [vmem:[%s860] ss:$8 sm:$0x3]
      %v956 = vlaneseq
      %v957 = vshrl.u32 %v956, 7
      %v958 = vsub.s32 0, %v957
      %v959 = vrot.slane %v954, %v958
      %v960 = vlaneseq
      %v961 = vshrl.u32 %v960, 7
      %v962 = vsub.s32 1, %v961
      %v963 = vrot.slane %v954, %v962
      %v964 = vcombine.low %v959, %v963
      %965 = vrot.lane.b32.xlu0 %v964, 119
      %v966 = vpop.permute.xlu0 %965
      %v967 = vrot.slane %v966, 4
      %v968 = vsel %vm621, %v967, %v966
      %v971 = vmul.f32 %v952, %v968
      %v972 = vmul.f32 %v953, %v967
      %v975 = vcombine.low %v971, %v971
      %v976 = vcombine.low %v972, %v972
      %977 = vrot.lane.b32.xlu0 %v975, 9
      %v978 = vpop.permute.xlu0 %977
      %979 = vrot.lane.b32.xlu0 %v971, 9
      %v980 = vpop.permute.xlu0 %979
      %981 = vrot.lane.b32.xlu0 %v976, 9
      %v982 = vpop.permute.xlu0 %981
      %v983 = vsel %vm605, %v978, %v980
      %v984 = vsel %vm605, %v980, %v982
      %987 = vst [vmem:[#allocation3 + $0xa0] sm:$0xf0] %v983
      %988 = vst [vmem:[#allocation3 + $0xa8] sm:$0xf0] %v984
      %v989 = vld [vmem:[#allocation2 + $0x8] sm:$0xff]
      %v991 = vcombine.high %v989, %v989
      %993 = vst [vmem:[#allocation3 + $0xb0] sm:$0xf] %v989
      %994 = vst [vmem:[#allocation3 + $0xb8] sm:$0xf] %v991
      %v995 = vld [vmem:[#allocation2 + $0x8] sm:$0xff]
      %v996 = vld [vmem:[#allocation2 + $0x10] sm:$0xf]
      %v997 = vld [vmem:[%s917] ss:$8 sm:$0x3]
      %v999 = vlaneseq
      %v1000 = vshrl.u32 %v999, 7
      %v1001 = vsub.s32 0, %v1000
      %v1002 = vrot.slane %v997, %v1001
      %v1003 = vlaneseq
      %v1004 = vshrl.u32 %v1003, 7
      %v1005 = vsub.s32 1, %v1004
      %v1006 = vrot.slane %v997, %v1005
      %v1007 = vcombine.low %v1002, %v1006
      %1008 = vrot.lane.b32.xlu0 %v1007, 9
      %v1009 = vpop.permute.xlu0 %1008
      %v1010 = vrot.slane %v1009, 4
      %v1011 = vsel %vm605, %v1010, %v1009
      %v1014 = vmul.f32 %v995, %v1011
      %v1015 = vmul.f32 %v996, %v1010
      %v1018 = vcombine.low %v1014, %v1014
      %v1019 = vcombine.low %v1015, %v1015
      %1020 = vrot.lane.b32.xlu0 %v1018, 119
      %v1021 = vpop.permute.xlu0 %1020
      %1022 = vrot.lane.b32.xlu0 %v1014, 119
      %v1023 = vpop.permute.xlu0 %1022
      %1024 = vrot.lane.b32.xlu0 %v1019, 119
      %v1025 = vpop.permute.xlu0 %1024
      %v1026 = vsel %vm621, %v1021, %v1023
      %v1027 = vsel %vm621, %v1023, %v1025
      %1030 = vst [vmem:[#allocation3 + $0xb0] sm:$0xf0] %v1026
      %1031 = vst [vmem:[#allocation3 + $0xb8] sm:$0xf0] %v1027
      %v1032 = vld [vmem:[#allocation2 + $0xc] sm:$0xff]
      %v1033 = vld [vmem:[#allocation2 + $0x14] sm:$0xf]
      %v1034 = vld [vmem:[%s860] ss:$8 sm:$0x3]
      %v1036 = vlaneseq
      %v1037 = vshrl.u32 %v1036, 7
      %v1038 = vsub.s32 0, %v1037
      %v1039 = vrot.slane %v1034, %v1038
      %v1040 = vlaneseq
      %v1041 = vshrl.u32 %v1040, 7
      %v1042 = vsub.s32 1, %v1041
      %v1043 = vrot.slane %v1034, %v1042
      %v1044 = vcombine.low %v1039, %v1043
      %1045 = vrot.lane.b32.xlu0 %v1044, 7
      %v1046 = vpop.permute.xlu0 %1045
      %v1047 = vrot.slane %v1046, 4
      %v1048 = vsel %vm717, %v1047, %v1046
      %v1051 = vmul.f32 %v1032, %v1048
      %v1052 = vmul.f32 %v1033, %v1047
      %v1055 = vcombine.high %v1051, %v1051
      %1056 = vrot.lane.b32.xlu0 %v1051, 121
      %v1057 = vpop.permute.xlu0 %1056
      %1058 = vrot.lane.b32.xlu0 %v1055, 121
      %v1059 = vpop.permute.xlu0 %1058
      %1060 = vrot.lane.b32.xlu0 %v1052, 121
      %v1061 = vpop.permute.xlu0 %1060
      %v1062 = vsel %vm702, %v1057, %v1059
      %v1063 = vsel %vm702, %v1059, %v1061
      %1066 = vst [vmem:[#allocation3 + $0xc0] sm:$0xf] %v1062
      %1067 = vst [vmem:[#allocation3 + $0xc8] sm:$0xf] %v1063
      %v1068 = vld [vmem:[#allocation2 + $0xc] sm:$0xff]
      %v1069 = vld [vmem:[#allocation2 + $0x14] sm:$0xf]
      %v1072 = vcombine.low %v1068, %v1068
      %v1073 = vcombine.low %v1069, %v1069
      %1074 = vrot.lane.b32.xlu0 %v1072, 112
      %v1075 = vpop.permute.xlu0 %1074
      %1076 = vrot.lane.b32.xlu0 %v1068, 112
      %v1077 = vpop.permute.xlu0 %1076
      %1078 = vrot.lane.b32.xlu0 %v1073, 112
      %v1079 = vpop.permute.xlu0 %1078
      %v1080 = vsel %vm639, %v1075, %v1077
      %v1081 = vsel %vm639, %v1077, %v1079
      %1084 = vst [vmem:[#allocation3 + $0xc0] sm:$0xf0] %v1080
      %1085 = vst [vmem:[#allocation3 + $0xc8] sm:$0xf0] %v1081
      %v1086 = vld [vmem:[#allocation2 + $0xc] sm:$0xff]
      %v1087 = vld [vmem:[#allocation2 + $0x14] sm:$0xf]
      %v1088 = vld [vmem:[%s917] ss:$8 sm:$0x3]
      %v1090 = vlaneseq
      %v1091 = vshrl.u32 %v1090, 7
      %v1092 = vsub.s32 0, %v1091
      %v1093 = vrot.slane %v1088, %v1092
      %v1094 = vlaneseq
      %v1095 = vshrl.u32 %v1094, 7
      %v1096 = vsub.s32 1, %v1095
      %v1097 = vrot.slane %v1088, %v1096
      %v1098 = vcombine.low %v1093, %v1097
      %1099 = vrot.lane.b32.xlu0 %v1098, 25
      %v1100 = vpop.permute.xlu0 %1099
      %v1101 = vrot.slane %v1100, 4
      %v1102 = vsel %vm890, %v1101, %v1100
      %v1105 = vmul.f32 %v1086, %v1102
      %v1106 = vmul.f32 %v1087, %v1101
      %v1109 = vcombine.high %v1105, %v1105
      %1110 = vrot.lane.b32.xlu0 %v1105, 103
      %v1111 = vpop.permute.xlu0 %1110
      %1112 = vrot.lane.b32.xlu0 %v1109, 103
      %v1113 = vpop.permute.xlu0 %1112
      %1114 = vrot.lane.b32.xlu0 %v1106, 103
      %v1115 = vpop.permute.xlu0 %1114
      %v1116 = vsel %vm875, %v1111, %v1113
      %v1117 = vsel %vm875, %v1113, %v1115
      %1120 = vst [vmem:[#allocation3 + $0xd0] sm:$0xf] %v1116
      %1121 = vst [vmem:[#allocation3 + $0xd8] sm:$0xf] %v1117
      %v1122 = vld [vmem:[#allocation2] sm:$0xff]
      %v1123 = vld [vmem:[#allocation2 + $0x8] sm:$0xf]
      %s1124 = scalar_lea.vmem %s4, 17
      %v1125 = vld [vmem:[%s1124] ss:$8 sm:$0x3]
      %v1127 = vlaneseq
      %v1128 = vshrl.u32 %v1127, 7
      %v1129 = vsub.s32 0, %v1128
      %v1130 = vrot.slane %v1125, %v1129
      %v1131 = vlaneseq
      %v1132 = vshrl.u32 %v1131, 7
      %v1133 = vsub.s32 1, %v1132
      %v1134 = vrot.slane %v1125, %v1133
      %v1135 = vcombine.low %v1130, %v1134
      %1136 = vrot.lane.b32.xlu0 %v1135, 69
      %v1137 = vpop.permute.xlu0 %1136
      %v1138 = vrot.slane %v1137, 4
      %vm1139 = vcmask 564224
      %v1140 = vsel %vm1139, %v1138, %v1137
      %v1143 = vmul.f32 %v1122, %v1140
      %v1144 = vmul.f32 %v1123, %v1138
      %v1147 = vcombine.low %v1143, %v1143
      %v1148 = vcombine.low %v1144, %v1144
      %1149 = vrot.lane.b32.xlu0 %v1147, 59
      %v1150 = vpop.permute.xlu0 %1149
      %1151 = vrot.lane.b32.xlu0 %v1143, 59
      %v1152 = vpop.permute.xlu0 %1151
      %1153 = vrot.lane.b32.xlu0 %v1148, 59
      %v1154 = vpop.permute.xlu0 %1153
      %vm1155 = vcmask 482304
      %v1156 = vsel %vm1155, %v1150, %v1152
      %v1157 = vsel %vm1155, %v1152, %v1154
      %1160 = vst [vmem:[#allocation3 + $0xd0] sm:$0xf0] %v1156
      %1161 = vst [vmem:[#allocation3 + $0xd8] sm:$0xf0] %v1157
      %v1162 = vld [vmem:[#allocation2] sm:$0xff]
      %v1163 = vld [vmem:[#allocation2 + $0x8] sm:$0xf]
      %v1166 = vcombine.high %v1162, %v1162
      %1167 = vrot.lane.b32.xlu0 %v1162, 48
      %v1168 = vpop.permute.xlu0 %1167
      %1169 = vrot.lane.b32.xlu0 %v1166, 48
      %v1170 = vpop.permute.xlu0 %1169
      %1171 = vrot.lane.b32.xlu0 %v1163, 48
      %v1172 = vpop.permute.xlu0 %1171
      %v1173 = vsel %vm545, %v1168, %v1170
      %v1174 = vsel %vm545, %v1170, %v1172
      %1177 = vst [vmem:[#allocation3 + $0xe0] sm:$0xf] %v1173
      %1178 = vst [vmem:[#allocation3 + $0xe8] sm:$0xf] %v1174
      %v1179 = vld [vmem:[#allocation2] sm:$0xff]
      %v1180 = vld [vmem:[#allocation2 + $0x8] sm:$0xf]
      %s1181 = scalar_lea.vmem %s4, 19
      %v1182 = vld [vmem:[%s1181] ss:$8 sm:$0x3]
      %v1184 = vlaneseq
      %v1185 = vshrl.u32 %v1184, 7
      %v1186 = vsub.s32 0, %v1185
      %v1187 = vrot.slane %v1182, %v1186
      %v1188 = vlaneseq
      %v1189 = vshrl.u32 %v1188, 7
      %v1190 = vsub.s32 1, %v1189
      %v1191 = vrot.slane %v1182, %v1190
      %v1192 = vcombine.low %v1187, %v1191
      %1193 = vrot.lane.b32.xlu0 %v1192, 91
      %v1194 = vpop.permute.xlu0 %1193
      %v1195 = vrot.slane %v1194, 4
      %vm1196 = vcmask 744448
      %v1197 = vsel %vm1196, %v1195, %v1194
      %v1200 = vmul.f32 %v1179, %v1197
      %v1201 = vmul.f32 %v1180, %v1195
      %v1204 = vcombine.low %v1200, %v1200
      %v1205 = vcombine.low %v1201, %v1201
      %1206 = vrot.lane.b32.xlu0 %v1204, 37
      %v1207 = vpop.permute.xlu0 %1206
      %1208 = vrot.lane.b32.xlu0 %v1200, 37
      %v1209 = vpop.permute.xlu0 %1208
      %1210 = vrot.lane.b32.xlu0 %v1205, 37
      %v1211 = vpop.permute.xlu0 %1210
      %vm1212 = vcmask 302080
      %v1213 = vsel %vm1212, %v1207, %v1209
      %v1214 = vsel %vm1212, %v1209, %v1211
      %1217 = vst [vmem:[#allocation3 + $0xe0] sm:$0xf0] %v1213
      %1218 = vst [vmem:[#allocation3 + $0xe8] sm:$0xf0] %v1214
      %v1219 = vld [vmem:[#allocation2 + $0x4] sm:$0xff]
      %v1220 = vld [vmem:[#allocation2 + $0xc] sm:$0xf]
      %v1221 = vld [vmem:[%s1124] ss:$8 sm:$0x3]
      %v1223 = vlaneseq
      %v1224 = vshrl.u32 %v1223, 7
      %v1225 = vsub.s32 0, %v1224
      %v1226 = vrot.slane %v1221, %v1225
      %v1227 = vlaneseq
      %v1228 = vshrl.u32 %v1227, 7
      %v1229 = vsub.s32 1, %v1228
      %v1230 = vrot.slane %v1221, %v1229
      %v1231 = vcombine.low %v1226, %v1230
      %1232 = vrot.lane.b32.xlu0 %v1231, 117
      %v1233 = vpop.permute.xlu0 %1232
      %v1234 = vrot.slane %v1233, 4
      %vm1235 = vcmask 957440
      %v1236 = vsel %vm1235, %v1234, %v1233
      %v1239 = vmul.f32 %v1219, %v1236
      %v1240 = vmul.f32 %v1220, %v1234
      %v1243 = vcombine.high %v1239, %v1239
      %1244 = vrot.lane.b32.xlu0 %v1239, 11
      %v1245 = vpop.permute.xlu0 %1244
      %1246 = vrot.lane.b32.xlu0 %v1243, 11
      %v1247 = vpop.permute.xlu0 %1246
      %1248 = vrot.lane.b32.xlu0 %v1240, 11
      %v1249 = vpop.permute.xlu0 %1248
      %vm1250 = vcmask 89088
      %v1251 = vsel %vm1250, %v1245, %v1247
      %v1252 = vsel %vm1250, %v1247, %v1249
      %1255 = vst [vmem:[#allocation3 + $0xf0] sm:$0xf] %v1251
      %1256 = vst [vmem:[#allocation3 + $0xf8] sm:$0xf] %v1252
      %v1257 = vld [vmem:[#allocation2 + $0x8] sm:$0xff]
      %v1259 = vcombine.low %v1257, %v1257
      %1261 = vst [vmem:[#allocation3 + $0xf0] sm:$0xf0] %v1259
      %1262 = vst [vmem:[#allocation3 + $0xf8] sm:$0xf0] %v1257
      %v1263 = vld [vmem:[#allocation2 + $0x8] sm:$0xff]
      %v1264 = vld [vmem:[#allocation2 + $0x10] sm:$0xf]
      %v1265 = vld [vmem:[%s1181] ss:$8 sm:$0x3]
      %v1267 = vlaneseq
      %v1268 = vshrl.u32 %v1267, 7
      %v1269 = vsub.s32 0, %v1268
      %v1270 = vrot.slane %v1265, %v1269
      %v1271 = vlaneseq
      %v1272 = vshrl.u32 %v1271, 7
      %v1273 = vsub.s32 1, %v1272
      %v1274 = vrot.slane %v1265, %v1273
      %v1275 = vcombine.low %v1270, %v1274
      %1276 = vrot.lane.b32.xlu0 %v1275, 11
      %v1277 = vpop.permute.xlu0 %1276
      %v1278 = vrot.slane %v1277, 4
      %v1279 = vsel %vm1250, %v1278, %v1277
      %v1282 = vmul.f32 %v1263, %v1279
      %v1283 = vmul.f32 %v1264, %v1278
      %v1286 = vcombine.high %v1282, %v1282
      %1287 = vrot.lane.b32.xlu0 %v1282, 117
      %v1288 = vpop.permute.xlu0 %1287
      %1289 = vrot.lane.b32.xlu0 %v1286, 117
      %v1290 = vpop.permute.xlu0 %1289
      %1291 = vrot.lane.b32.xlu0 %v1283, 117
      %v1292 = vpop.permute.xlu0 %1291
      %v1293 = vsel %vm1235, %v1288, %v1290
      %v1294 = vsel %vm1235, %v1290, %v1292
      %1297 = vst [vmem:[#allocation3 + $0x100] sm:$0xf] %v1293
      %1298 = vst [vmem:[#allocation3 + $0x108] sm:$0xf] %v1294
      %v1299 = vld [vmem:[#allocation2 + $0xc] sm:$0xff]
      %v1300 = vld [vmem:[#allocation2 + $0x14] sm:$0xf]
      %v1301 = vld [vmem:[%s1124] ss:$8 sm:$0x3]
      %v1303 = vlaneseq
      %v1304 = vshrl.u32 %v1303, 7
      %v1305 = vsub.s32 0, %v1304
      %v1306 = vrot.slane %v1301, %v1305
      %v1307 = vlaneseq
      %v1308 = vshrl.u32 %v1307, 7
      %v1309 = vsub.s32 1, %v1308
      %v1310 = vrot.slane %v1301, %v1309
      %v1311 = vcombine.low %v1306, %v1310
      %1312 = vrot.lane.b32.xlu0 %v1311, 37
      %v1313 = vpop.permute.xlu0 %1312
      %v1314 = vrot.slane %v1313, 4
      %v1315 = vsel %vm1212, %v1314, %v1313
      %v1318 = vmul.f32 %v1299, %v1315
      %v1319 = vmul.f32 %v1300, %v1314
      %v1322 = vcombine.low %v1318, %v1318
      %v1323 = vcombine.low %v1319, %v1319
      %1324 = vrot.lane.b32.xlu0 %v1322, 91
      %v1325 = vpop.permute.xlu0 %1324
      %1326 = vrot.lane.b32.xlu0 %v1318, 91
      %v1327 = vpop.permute.xlu0 %1326
      %1328 = vrot.lane.b32.xlu0 %v1323, 91
      %v1329 = vpop.permute.xlu0 %1328
      %v1330 = vsel %vm1196, %v1325, %v1327
      %v1331 = vsel %vm1196, %v1327, %v1329
      %1334 = vst [vmem:[#allocation3 + $0x100] sm:$0xf0] %v1330
      %1335 = vst [vmem:[#allocation3 + $0x108] sm:$0xf0] %v1331
      %v1336 = vld [vmem:[#allocation2 + $0xc] sm:$0xff]
      %v1337 = vld [vmem:[#allocation2 + $0x14] sm:$0xf]
      %v1340 = vcombine.high %v1336, %v1336
      %1341 = vrot.lane.b32.xlu0 %v1336, 80
      %v1342 = vpop.permute.xlu0 %1341
      %1343 = vrot.lane.b32.xlu0 %v1340, 80
      %v1344 = vpop.permute.xlu0 %1343
      %1345 = vrot.lane.b32.xlu0 %v1337, 80
      %v1346 = vpop.permute.xlu0 %1345
      %v1347 = vsel %vm369, %v1342, %v1344
      %v1348 = vsel %vm369, %v1344, %v1346
      %1351 = vst [vmem:[#allocation3 + $0x110] sm:$0xf] %v1347
      %1352 = vst [vmem:[#allocation3 + $0x118] sm:$0xf] %v1348
      %v1353 = vld [vmem:[#allocation2 + $0xc] sm:$0xff]
      %v1354 = vld [vmem:[#allocation2 + $0x14] sm:$0xf]
      %v1355 = vld [vmem:[%s1181] ss:$8 sm:$0x3]
      %v1357 = vlaneseq
      %v1358 = vshrl.u32 %v1357, 7
      %v1359 = vsub.s32 0, %v1358
      %v1360 = vrot.slane %v1355, %v1359
      %v1361 = vlaneseq
      %v1362 = vshrl.u32 %v1361, 7
      %v1363 = vsub.s32 1, %v1362
      %v1364 = vrot.slane %v1355, %v1363
      %v1365 = vcombine.low %v1360, %v1364
      %1366 = vrot.lane.b32.xlu0 %v1365, 59
      %v1367 = vpop.permute.xlu0 %1366
      %v1368 = vrot.slane %v1367, 4
      %v1369 = vsel %vm1155, %v1368, %v1367
      %v1372 = vmul.f32 %v1353, %v1369
      %v1373 = vmul.f32 %v1354, %v1368
      %v1376 = vcombine.low %v1372, %v1372
      %v1377 = vcombine.low %v1373, %v1373
      %1378 = vrot.lane.b32.xlu0 %v1376, 69
      %v1379 = vpop.permute.xlu0 %1378
      %1380 = vrot.lane.b32.xlu0 %v1372, 69
      %v1381 = vpop.permute.xlu0 %1380
      %1382 = vrot.lane.b32.xlu0 %v1377, 69
      %v1383 = vpop.permute.xlu0 %1382
      %v1384 = vsel %vm1139, %v1379, %v1381
      %v1385 = vsel %vm1139, %v1381, %v1383
      %1388 = vst [vmem:[#allocation3 + $0x110] sm:$0xf0] %v1384
      %1389 = vst [vmem:[#allocation3 + $0x118] sm:$0xf0] %v1385
      %v1390 = vld [vmem:[#allocation3] sm:$0xff]
      %v1391 = vld [vmem:[#allocation3 + $0x8] sm:$0xff]
      %v1392 = vld [vmem:[#allocation3 + $0x10] sm:$0xff]
      %v1393 = vld [vmem:[#allocation3 + $0x18] sm:$0xff]
      %v1394 = vld [vmem:[#allocation3 + $0x20] sm:$0xff]
      %v1395 = vld [vmem:[#allocation3 + $0x28] sm:$0xff]
      %v1396 = vld [vmem:[#allocation3 + $0x30] sm:$0xff]
      %v1397 = vld [vmem:[#allocation3 + $0x38] sm:$0xff]
      %v1398 = vld [vmem:[#allocation3 + $0x40] sm:$0xff]
      %v1399 = vld [vmem:[#allocation3 + $0x48] sm:$0xff]
      %v1400 = vld [vmem:[#allocation3 + $0x50] sm:$0xff]
      %v1401 = vld [vmem:[#allocation3 + $0x58] sm:$0xff]
      %v1402 = vld [vmem:[#allocation3 + $0x60] sm:$0xff]
      %v1403 = vld [vmem:[#allocation3 + $0x68] sm:$0xff]
      %v1404 = vld [vmem:[#allocation3 + $0x70] sm:$0xff]
      %v1405 = vld [vmem:[#allocation3 + $0x78] sm:$0xff]
      %v1406 = vld [vmem:[#allocation3 + $0x80] sm:$0xff]
      %v1407 = vld [vmem:[#allocation3 + $0x88] sm:$0xff]
      %v1408 = vld [vmem:[#allocation3 + $0x90] sm:$0xff]
      %v1409 = vld [vmem:[#allocation3 + $0x98] sm:$0xff]
      %v1410 = vld [vmem:[#allocation3 + $0xa0] sm:$0xff]
      %v1411 = vld [vmem:[#allocation3 + $0xa8] sm:$0xff]
      %v1412 = vld [vmem:[#allocation3 + $0xb0] sm:$0xff]
      %v1413 = vld [vmem:[#allocation3 + $0xb8] sm:$0xff]
      %v1414 = vld [vmem:[#allocation3 + $0xc0] sm:$0xff]
      %v1415 = vld [vmem:[#allocation3 + $0xc8] sm:$0xff]
      %v1416 = vld [vmem:[#allocation3 + $0xd0] sm:$0xff]
      %v1417 = vld [vmem:[#allocation3 + $0xd8] sm:$0xff]
      %v1418 = vld [vmem:[#allocation3 + $0xe0] sm:$0xff]
      %v1419 = vld [vmem:[#allocation3 + $0xe8] sm:$0xff]
      %v1420 = vld [vmem:[#allocation3 + $0xf0] sm:$0xff]
      %v1421 = vld [vmem:[#allocation3 + $0xf8] sm:$0xff]
      %v1422 = vld [vmem:[#allocation3 + $0x100] sm:$0xff]
      %v1423 = vld [vmem:[#allocation3 + $0x108] sm:$0xff]
      %v1424 = vld [vmem:[#allocation3 + $0x110] sm:$0xff]
      %v1425 = vld [vmem:[#allocation3 + $0x118] sm:$0xff]
      %v1427 = vcombine.high %v227, %v227
      %v1428 = vsel %vm814, %v1427, 0
      %1430 = vmatprep.subr.mxu0 %v1391
      %1431 = vmatpush1.msra.mxu0 %v1390
      %1432 = vmatprep.subr.mxu0 %v1393
      %1433 = vmatpush1.msra.mxu0 %v1392
      %1434 = vmatprep.subr.mxu0 %v1395
      %1435 = vmatpush1.msra.mxu0 %v1394
      %1436 = vmatprep.subr.mxu0 %v1397
      %1437 = vmatpush1.msra.mxu0 %v1396
      %1438 = vmatprep.subr.mxu0 %v1399
      %1439 = vmatpush1.msra.mxu0 %v1398
      %1440 = vmatprep.subr.mxu0 %v1401
      %1441 = vmatpush1.msra.mxu0 %v1400
      %1442 = vmatprep.subr.mxu0 %v1403
      %1443 = vmatpush1.msra.mxu0 %v1402
      %1444 = vmatprep.subr.mxu0 %v1405
      %1445 = vmatpush1.msra.mxu0 %v1404
      %1446 = vmatprep.subr.mxu0 %v1407
      %1447 = vmatpush1.msra.mxu0 %v1406
      %1448 = vmatprep.subr.mxu0 %v1409
      %1449 = vmatpush1.msra.mxu0 %v1408
      %1450 = vmatprep.subr.mxu0 %v1411
      %1451 = vmatpush1.msra.mxu0 %v1410
      %1452 = vmatprep.subr.mxu0 %v1413
      %1453 = vmatpush1.msra.mxu0 %v1412
      %1454 = vmatprep.subr.mxu0 %v1415
      %1455 = vmatpush1.msra.mxu0 %v1414
      %1456 = vmatprep.subr.mxu0 %v1417
      %1457 = vmatpush1.msra.mxu0 %v1416
      %1458 = vmatprep.subr.mxu0 %v1419
      %1459 = vmatpush1.msra.mxu0 %v1418
      %1460 = vmatprep.subr.mxu0 %v1421
      %1461 = vmatpush1.msra.mxu0 %v1420
      %1462 = vmatprep.subr.mxu0 %v1423
      %1463 = vmatpush1.msra.mxu0 %v1422
      %1464 = vmatprep.subr.mxu0 %v1425
      %1465 = vmatpush1.msra.mxu0 %v1424
      %1466 = vmatprep.subr.mxu0 0.0
      %1467 = vmatpush1.msra.mxu0 0.0
      %1468 = vmatprep.subr.mxu0 0.0
      %1469 = vmatpush1.msra.mxu0 0.0
      %1470 = vmatprep.subr.mxu0 0.0
      %1471 = vmatpush1.msra.mxu0 0.0
      %1472 = vmatprep.subr.mxu0 0.0
      %1473 = vmatpush1.msra.mxu0 0.0
      %1474 = vmatprep.subr.mxu0 0.0
      %1475 = vmatpush1.msra.mxu0 0.0
      %1476 = vmatprep.subr.mxu0 0.0
      %1477 = vmatpush1.msra.mxu0 0.0
      %1478 = vmatprep.subr.mxu0 0.0
      %1479 = vmatpush1.msra.mxu0 0.0
      %1480 = vmatprep.subr.mxu0 0.0
      %1481 = vmatpush1.msra.mxu0 0.0
      %1482 = vmatprep.subr.mxu0 0.0
      %1483 = vmatpush1.msra.mxu0 0.0
      %1484 = vmatprep.subr.mxu0 0.0
      %1485 = vmatpush1.msra.mxu0 0.0
      %1486 = vmatprep.subr.mxu0 0.0
      %1487 = vmatpush1.msra.mxu0 0.0
      %1488 = vmatprep.subr.mxu0 0.0
      %1489 = vmatpush1.msra.mxu0 0.0
      %1490 = vmatprep.subr.mxu0 0.0
      %1491 = vmatpush1.msra.mxu0 0.0
      %1492 = vmatprep.subr.mxu0 0.0
      %1493 = vmatpush1.msra.mxu0 0.0
      %1494 = vmatprep.mubr.f32.mxu0 %v1428
      %1495 = vmatmul.mubr.f32.gmra.mrb[0].mxu0 %v227
      %v1496 = vpop.f32.mrb[0].mxu0
      %v1497 = vadd.f32 0.0, %v1496
      %v1498 = vpop.f32.mrb[0].mxu0
      %v1499 = vadd.f32 0.0, %v1498
      %1500 = vdwg.mxu0
      %v1503 = vcombine.low %v1497, %v1499
      %1505 = vst [vmem:[%s224] sm:$0xff] %v1503
      %p1506 = scmp.lt.s32.totalorder %s16, 1
      %s1507 = scalar_select %p1506, %s16, 1
      %s1508 = smul.addr %s1507, 2
      %s1509 = smul.addr %s1508, 4
      %s1510 = scalar_lea.vmem %s5, %s1509
      // Predicated region
      $region41: #{quant_cdcm.1} parent=39 // pred_check
        %p1511 = pneg %p144
      $region42: #{quant_cdcm.1} parent=39 // pred_check_branch
        %1513 = sbr.rel (%p1511) target = $region44
      $region43: #{quant_cdcm.1} parent=39 // pred_region
        _
      $region44: #{quant_cdcm.1} parent=39 // pred_fallthru
        _
    $region40: #{quant_cdcm.1} parent=5 // pred_fallthru
      _
    %p1514 = scmp.le.s32.totalorder 2, %s11
    // Predicated region
    $region45: #{quant_cdcm.1} parent=5 // pred_check
      %p1515 = pneg %p1514
    $region46: #{quant_cdcm.1} parent=5 // pred_check_branch
      %1517 = sbr.rel (%p1515) target = $region48
    $region47: #{quant_cdcm.1} parent=5 // pred_region
      %s1518 = ssub.s32 %s11, 2
      // Predicated region
      $region49: #{quant_cdcm.1} parent=47 // pred_check
        %p1519 = pneg %p150
      $region50: #{quant_cdcm.1} parent=47 // pred_check_branch
        %1521 = sbr.rel (%p1519) target = $region52
      $region51: #{quant_cdcm.1} parent=47 // pred_region
        %p1522 = scmp.lt.s32.totalorder %s17, 1
        %s1523 = scalar_select %p1522, %s17, 1
        %s1524 = smul.addr %s1523, 2
        %s1525 = smul.addr %s1524, 4
        %s1526 = scalar_lea.vmem %s5, %s1525
      $region52: #{quant_cdcm.1} parent=47 // pred_fallthru
        _
    $region48: #{quant_cdcm.1} parent=5 // pred_fallthru
      _
  $region6: #{quant_cdcm.1} parent=0 // loop_footer
    %s15 = sadd.s32 1, %s11
  $region7: #{quant_cdcm.1} parent=0 // loop_footer_branch
    %10 = sbr.rel target = $region3
  $region8: #{quant_cdcm.1} parent=0 // loop_exit
    _

</llo_original>
